<compile_context>
chip_gen: v7x
topology: tpu7x:2x2x1
jax: 0.10.0
libtpu: 0.0.40
codegen_flags: <defaults>
</compile_context>

<pallas_src>
import numpy as np
import jax
import jax.numpy as jnp
from jax import lax
from jax.experimental import pallas as pl
from jax.experimental.pallas import tpu as pltpu

DIM_HIDDEN = 64           # dim_hidden default of the module
K1, K2 = 5, 3             # conv kernel sizes
STRIDE2 = 2               # second conv stride
EPS = 1e-5                # BatchNorm eps (PyTorch default)
LEAKY_SLOPE = 0.01        # LeakyReLU default slope


def _critic_kernel(xw_ref, w1_ref, w2_ref, wf1_ref, wf2_ref, wf3_ref, vec_ref,
                   out_ref):
    f32, bf16 = jnp.float32, jnp.bfloat16
    B = xw_ref.shape[0]
    H = w2_ref.shape[1]            # 64
    KH = w2_ref.shape[0]           # K2 * H = 192
    L2 = wf1_ref.shape[0] // H     # 7
    H2 = wf2_ref.shape[1]          # 32

    leaky = lambda v: jnp.where(v >= 0, v, LEAKY_SLOPE * v)
    relu = lambda v: jnp.maximum(v, 0.0)

    # ---- Conv1d(3 -> H, k=5) as ONE wide matmul: (B, C*L) @ (C*L, L1*H) ----
    y1 = jnp.dot(xw_ref[...].astype(bf16), w1_ref[...],
                 preferred_element_type=f32)                  # (B, L1*H) f32

    # ---- BN1 (train mode, biased var, two-pass) + LeakyReLU on wide layout.
    # 128-lane aligned chunk adds + one roll(64) fold; per-channel vectors kept
    # "doubled" to 128 lanes so every broadcast is a full-vreg copy.
    # TODO(synk): running_mean/running_var buffer updates (training-mode side
    # effect) are not reproduced; they do not affect the forward output.
    n_chunks = y1.shape[1] // 128                              # 8
    n1 = float(B * (y1.shape[1] // H))                         # B * L1

    def chunk_fold(row):          # (1, L1*H) -> (1, 128) doubled channel sums
        acc = row[:, 0:128]
        for u in range(1, n_chunks):
            acc = acc + row[:, 128 * u:128 * (u + 1)]
        return acc + pltpu.roll(acc, shift=64, axis=1)

    def tile128(v):               # (1, 128) -> (1, L1*H), aligned copies
        return jnp.concatenate([v] * n_chunks, axis=1)

    bsum = jnp.sum(y1, axis=0, keepdims=True)                  # (1, L1*H)
    mean1d = chunk_fold(bsum) / n1                             # (1, 128)
    cent1 = y1 - tile128(mean1d)
    var1d = chunk_fold(jnp.sum(cent1 * cent1, axis=0, keepdims=True)) / n1
    scale1d = vec_ref[0:1, :] * lax.rsqrt(var1d + EPS)         # gamma1 doubled
    h1 = leaky(cent1 * tile128(scale1d) + tile128(vec_ref[1:2, :]))
    h1b = h1.astype(bf16)                                      # (B, L1*H)

    # ---- Conv1d(H -> H, k=3, stride=2) as ONE im2col matmul.
    # Window for output position t starts at lane 2*t*H = 128*t (vreg aligned).
    im = jnp.concatenate([h1b[:, 128 * t:128 * t + KH] for t in range(L2)],
                         axis=0)                               # (B*L2, K2*H), rows (t, b)
    y2 = jnp.dot(im, w2_ref[...], preferred_element_type=f32)  # (B*L2, H) f32

    # ---- BN2 + LeakyReLU on the stacked layout: plain sublane-axis reduce ----
    n2 = float(y2.shape[0])                                    # B * L2
    mean2 = jnp.sum(y2, axis=0, keepdims=True) / n2            # (1, H)
    cent2 = y2 - mean2
    var2 = jnp.sum(cent2 * cent2, axis=0, keepdims=True) / n2
    scale2 = vec_ref[2:3, 0:H] * lax.rsqrt(var2 + EPS)
    zn = leaky(cent2 * scale2 + vec_ref[3:4, 0:H])             # (B*L2, H) f32
    znb = zn.astype(bf16)

    # ---- flatten + Linear(7H -> H): L2 accumulated (B,H)@(H,H) matmuls
    # (PyTorch channel-major flatten order folded into wf1 row permutation).
    hid = jnp.dot(znb[0:B, :], wf1_ref[0:H, :], preferred_element_type=f32)
    for t in range(1, L2):
        hid = hid + jnp.dot(znb[t * B:(t + 1) * B, :],
                            wf1_ref[t * H:(t + 1) * H, :],
                            preferred_element_type=f32)
    hid = relu(hid + vec_ref[4:5, 0:H])                        # (B, H)

    hid2 = relu(jnp.dot(hid.astype(bf16), wf2_ref[...],
                        preferred_element_type=f32) + vec_ref[5:6, 0:H2])
    logit = jnp.dot(hid2.astype(bf16), wf3_ref[...],
                    preferred_element_type=f32) + vec_ref[6:7, 0:1]   # (B, 1)

    # Numerically stable, exact sigmoid (no approx reciprocal, no exp overflow).
    e = jnp.exp(-jnp.abs(logit))
    out_ref[...] = jnp.where(logit >= 0, 1.0 / (1.0 + e), e / (1.0 + e))


def init_params(key, dim_hidden=DIM_HIDDEN):
    dh = dim_hidden
    ks = jax.random.split(key, 12)
    p = {}
    p["w_conv1"] = jax.random.normal(ks[0], (dh, 3, K1), jnp.float32) * np.sqrt(2.0 / (3 * K1))
    p["bn1_gamma"] = 1.0 + 0.1 * jax.random.normal(ks[1], (dh,), jnp.float32)
    p["bn1_beta"] = 0.1 * jax.random.normal(ks[2], (dh,), jnp.float32)
    p["w_conv2"] = jax.random.normal(ks[3], (dh, dh, K2), jnp.float32) * np.sqrt(2.0 / (dh * K2))
    p["bn2_gamma"] = 1.0 + 0.1 * jax.random.normal(ks[4], (dh,), jnp.float32)
    p["bn2_beta"] = 0.1 * jax.random.normal(ks[5], (dh,), jnp.float32)
    p["w_fc1"] = jax.random.normal(ks[6], (dh, 7 * dh), jnp.float32) * np.sqrt(2.0 / (7 * dh))
    p["b_fc1"] = 0.1 * jax.random.normal(ks[7], (dh,), jnp.float32)
    p["w_fc2"] = jax.random.normal(ks[8], (dh // 2, dh), jnp.float32) * np.sqrt(2.0 / dh)
    p["b_fc2"] = 0.1 * jax.random.normal(ks[9], (dh // 2,), jnp.float32)
    p["w_fc3"] = jax.random.normal(ks[10], (1, dh // 2), jnp.float32) * np.sqrt(2.0 / (dh // 2))
    p["b_fc3"] = 0.1 * jax.random.normal(ks[11], (1,), jnp.float32)
    return p


def prepare_params(params, length=20):
    """One-time prep (hoisted out of the hot path):
    * conv1 taps + input transpose folded into a block-Toeplitz matrix,
    * conv2 packed as an im2col weight (no zero inflation),
    * FC1 weight permuted for the stacked (t, b) conv2 layout / PyTorch flatten,
    * all BN scale/shift + FC biases packed into one (8, 128) f32 operand,
    * matmul weights cast to bf16."""
    w1 = np.asarray(params["w_conv1"], np.float32)        # (H, 3, K1)
    w2 = np.asarray(params["w_conv2"], np.float32)        # (H, H, K2)
    H, C_in = w1.shape[0], w1.shape[1]
    L = length
    L1 = L - K1 + 1
    L2 = (L1 - K2) // STRIDE2 + 1
    assert 2 * H == 128, "kernel assumes two channel blocks per 128-lane vreg"
    assert (L1 * H) % 128 == 0

    # conv1 Toeplitz with the input transpose folded in:
    # W1w[cin*L + p, t*H + cout] = w1[cout, cin, p - t]
    W1w = np.zeros((C_in * L, L1 * H), np.float32)
    for t in range(L1):
        for k in range(K1):
            p = t + k
            W1w[p::L, t * H:(t + 1) * H] = w1[:, :, k].T   # rows cin*L + p

    # conv2 im2col weight: W2c[k*H + cin, cout] = w2[cout, cin, k]
    W2c = np.transpose(w2, (2, 1, 0)).reshape(K2 * H, H)

    # FC1: stacked row index is t*H + c, PyTorch flat input index is c*L2 + t.
    wf1 = (np.asarray(params["w_fc1"], np.float32)
           .reshape(H, H, L2).transpose(2, 1, 0).reshape(L2 * H, H))

    vecs = np.zeros((8, 128), np.float32)
    vecs[0, :2 * H] = np.tile(np.asarray(params["bn1_gamma"], np.float32), 2)
    vecs[1, :2 * H] = np.tile(np.asarray(params["bn1_beta"], np.float32), 2)
    vecs[2, :H] = np.asarray(params["bn2_gamma"], np.float32)
    vecs[3, :H] = np.asarray(params["bn2_beta"], np.float32)
    vecs[4, :H] = np.asarray(params["b_fc1"], np.float32)
    vecs[5, :H // 2] = np.asarray(params["b_fc2"], np.float32)
    vecs[6, 0] = float(np.asarray(params["b_fc3"], np.float32)[0])

    return {
        "w1w": jnp.asarray(W1w, jnp.bfloat16),
        "w2c": jnp.asarray(W2c, jnp.bfloat16),
        "wf1": jnp.asarray(wf1, jnp.bfloat16),
        "wf2": jnp.asarray(np.asarray(params["w_fc2"], np.float32).T, jnp.bfloat16),
        "wf3": jnp.asarray(np.asarray(params["w_fc3"], np.float32).T, jnp.bfloat16),
        "vecs": jnp.asarray(vecs),
    }


@jax.jit
def critic_forward(x, kp):
    """x: (B, 3, L) in PyTorch NCW layout; returns (B, 1) sigmoid scores."""
    B, C, L = x.shape
    # Only per-call data prep: contiguous reshape (transpose is folded in w1w).
    xw = x.reshape(B, C * L).astype(jnp.float32)
    assert xw.shape[1] == kp["w1w"].shape[0], "input length mismatch with prepared weights"
    # Single invocation, no grid (everything VMEM-resident).  Train-mode BN
    # couples the whole B=2 batch, so the batch is never split across steps.
    return pl.pallas_call(
        _critic_kernel,
        out_shape=jax.ShapeDtypeStruct((B, 1), jnp.float32),
    )(xw, kp["w1w"], kp["w2c"], kp["wf1"], kp["wf2"], kp["wf3"], kp["vecs"])


def critic_reference(x, params):
    """Pure-JAX f32 mirror of the PyTorch module (train-mode BatchNorm)."""
    def bn_train(y, gamma, beta):
        mean = jnp.mean(y, axis=(0, 2), keepdims=True)
        var = jnp.var(y, axis=(0, 2), keepdims=True)        # biased, as PyTorch normalizes
        yhat = (y - mean) * lax.rsqrt(var + EPS)
        return yhat * gamma.reshape(1, -1, 1) + beta.reshape(1, -1, 1)

    leaky = lambda v: jnp.where(v >= 0, v, LEAKY_SLOPE * v)
    dn = ("NCH", "OIH", "NCH")
    y = lax.conv_general_dilated(x, params["w_conv1"], (1,), "VALID", dimension_numbers=dn)
    y = leaky(bn_train(y, params["bn1_gamma"], params["bn1_beta"]))
    y = lax.conv_general_dilated(y, params["w_conv2"], (STRIDE2,), "VALID", dimension_numbers=dn)
    y = leaky(bn_train(y, params["bn2_gamma"], params["bn2_beta"]))
    z = y.reshape(y.shape[0], -1)                           # channel-major flatten
    h = jnp.maximum(z @ params["w_fc1"].T + params["b_fc1"], 0.0)
    h = jnp.maximum(h @ params["w_fc2"].T + params["b_fc2"], 0.0)
    return jax.nn.sigmoid(h @ params["w_fc3"].T + params["b_fc3"])


if __name__ == "__main__":
    key = jax.random.PRNGKey(0)
    k_x, k_p = jax.random.split(key)
    # L=20 is the length implied by the module: (20-4) -> 16, (16-3)//2+1 -> 7
    # positions, matching Linear(7 * dim_hidden, dim_hidden).
    B, L = 2, 20
    x = jax.random.normal(k_x, (B, 3, L), jnp.float32)
    params = init_params(k_p)
    kparams = prepare_params(params, length=L)              # one-time prep

    out = critic_forward(x, kparams)
    out = jax.block_until_ready(out)

    ref = critic_reference(x, params)
    # bf16 matmul operands (f32 accumulation) vs the f32 reference -> loose atol.
    np.testing.assert_allclose(np.asarray(out), np.asarray(ref), atol=4e-2, rtol=0.0)
    assert out.shape == (B, 1)
    print("KERNEL_OK")
</pallas_src>

<mosaic_0001>
module attributes {stable_mosaic.version = 11 : i64} {
  func.func @_critic_kernel(%arg0: memref<2x60xf32, #tpu.memory_space<vmem>>, %arg1: memref<60x1024xbf16, #tpu.memory_space<vmem>>, %arg2: memref<192x64xbf16, #tpu.memory_space<vmem>>, %arg3: memref<448x64xbf16, #tpu.memory_space<vmem>>, %arg4: memref<64x32xbf16, #tpu.memory_space<vmem>>, %arg5: memref<32x1xbf16, #tpu.memory_space<vmem>>, %arg6: memref<8x128xf32, #tpu.memory_space<vmem>>, %arg7: memref<2x1xf32, #tpu.memory_space<vmem>>) attributes {dimension_semantics = [], scalar_prefetch = 0 : i64, scratch_operands = 0 : i64, tpu.core_type = #tpu.core_type<tc>} {
    %c0 = arith.constant 0 : index
    %c0_0 = arith.constant 0 : index
    %0 = vector.load %arg0[%c0, %c0_0] : memref<2x60xf32, #tpu.memory_space<vmem>>, vector<2x60xf32>
    %1 = arith.truncf %0 : vector<2x60xf32> to vector<2x60xbf16>
    %c0_1 = arith.constant 0 : index
    %c0_2 = arith.constant 0 : index
    %2 = vector.load %arg1[%c0_1, %c0_2] : memref<60x1024xbf16, #tpu.memory_space<vmem>>, vector<60x1024xbf16>
    %cst = arith.constant dense<0.000000e+00> : vector<2x1024xf32>
    %3 = tpu.matmul %1, %2, %cst {dimension_numbers = #tpu.dot_dimension_numbers<[1], [0], [0], [1], [0, 0, 1, 1], [], []>} : vector<2x60xbf16>, vector<60x1024xbf16>, vector<2x1024xf32> -> vector<2x1024xf32>
    %cst_3 = arith.constant dense<0.000000e+00> : vector<1024xf32>
    %4 = vector.multi_reduction <add>, %3, %cst_3 [0] : vector<2x1024xf32> to vector<1024xf32>
    %5 = vector.shape_cast %4 : vector<1024xf32> to vector<1x1024xf32>
    %6 = vector.extract_strided_slice %5 {offsets = [0, 0], sizes = [1, 128], strides = [1, 1]} : vector<1x1024xf32> to vector<1x128xf32>
    %7 = vector.extract_strided_slice %5 {offsets = [0, 128], sizes = [1, 128], strides = [1, 1]} : vector<1x1024xf32> to vector<1x128xf32>
    %8 = arith.addf %6, %7 : vector<1x128xf32>
    %9 = vector.extract_strided_slice %5 {offsets = [0, 256], sizes = [1, 128], strides = [1, 1]} : vector<1x1024xf32> to vector<1x128xf32>
    %10 = arith.addf %8, %9 : vector<1x128xf32>
    %11 = vector.extract_strided_slice %5 {offsets = [0, 384], sizes = [1, 128], strides = [1, 1]} : vector<1x1024xf32> to vector<1x128xf32>
    %12 = arith.addf %10, %11 : vector<1x128xf32>
    %13 = vector.extract_strided_slice %5 {offsets = [0, 512], sizes = [1, 128], strides = [1, 1]} : vector<1x1024xf32> to vector<1x128xf32>
    %14 = arith.addf %12, %13 : vector<1x128xf32>
    %15 = vector.extract_strided_slice %5 {offsets = [0, 640], sizes = [1, 128], strides = [1, 1]} : vector<1x1024xf32> to vector<1x128xf32>
    %16 = arith.addf %14, %15 : vector<1x128xf32>
    %17 = vector.extract_strided_slice %5 {offsets = [0, 768], sizes = [1, 128], strides = [1, 1]} : vector<1x1024xf32> to vector<1x128xf32>
    %18 = arith.addf %16, %17 : vector<1x128xf32>
    %19 = vector.extract_strided_slice %5 {offsets = [0, 896], sizes = [1, 128], strides = [1, 1]} : vector<1x1024xf32> to vector<1x128xf32>
    %20 = arith.addf %18, %19 : vector<1x128xf32>
    %c64_i32 = arith.constant 64 : i32
    %21 = tpu.dynamic_rotate %20 by %c64_i32 dim 1 : vector<1x128xf32>, i32 -> vector<1x128xf32>
    %22 = arith.addf %20, %21 : vector<1x128xf32>
    %cst_4 = arith.constant 3.200000e+01 : f32
    %23 = vector.broadcast %cst_4 : f32 to vector<1x128xf32>
    %24 = arith.divf %22, %23 : vector<1x128xf32>
    %25 = tpu.concatenate %24, %24, %24, %24, %24, %24, %24, %24 in 1 : vector<1x128xf32>, vector<1x128xf32>, vector<1x128xf32>, vector<1x128xf32>, vector<1x128xf32>, vector<1x128xf32>, vector<1x128xf32>, vector<1x128xf32> -> vector<1x1024xf32>
    %26 = vector.broadcast %25 : vector<1x1024xf32> to vector<2x1024xf32>
    %27 = arith.subf %3, %26 : vector<2x1024xf32>
    %28 = arith.mulf %27, %27 : vector<2x1024xf32>
    %cst_5 = arith.constant dense<0.000000e+00> : vector<1024xf32>
    %29 = vector.multi_reduction <add>, %28, %cst_5 [0] : vector<2x1024xf32> to vector<1024xf32>
    %30 = vector.shape_cast %29 : vector<1024xf32> to vector<1x1024xf32>
    %31 = vector.extract_strided_slice %30 {offsets = [0, 0], sizes = [1, 128], strides = [1, 1]} : vector<1x1024xf32> to vector<1x128xf32>
    %32 = vector.extract_strided_slice %30 {offsets = [0, 128], sizes = [1, 128], strides = [1, 1]} : vector<1x1024xf32> to vector<1x128xf32>
    %33 = arith.addf %31, %32 : vector<1x128xf32>
    %34 = vector.extract_strided_slice %30 {offsets = [0, 256], sizes = [1, 128], strides = [1, 1]} : vector<1x1024xf32> to vector<1x128xf32>
    %35 = arith.addf %33, %34 : vector<1x128xf32>
    %36 = vector.extract_strided_slice %30 {offsets = [0, 384], sizes = [1, 128], strides = [1, 1]} : vector<1x1024xf32> to vector<1x128xf32>
    %37 = arith.addf %35, %36 : vector<1x128xf32>
    %38 = vector.extract_strided_slice %30 {offsets = [0, 512], sizes = [1, 128], strides = [1, 1]} : vector<1x1024xf32> to vector<1x128xf32>
    %39 = arith.addf %37, %38 : vector<1x128xf32>
    %40 = vector.extract_strided_slice %30 {offsets = [0, 640], sizes = [1, 128], strides = [1, 1]} : vector<1x1024xf32> to vector<1x128xf32>
    %41 = arith.addf %39, %40 : vector<1x128xf32>
    %42 = vector.extract_strided_slice %30 {offsets = [0, 768], sizes = [1, 128], strides = [1, 1]} : vector<1x1024xf32> to vector<1x128xf32>
    %43 = arith.addf %41, %42 : vector<1x128xf32>
    %44 = vector.extract_strided_slice %30 {offsets = [0, 896], sizes = [1, 128], strides = [1, 1]} : vector<1x1024xf32> to vector<1x128xf32>
    %45 = arith.addf %43, %44 : vector<1x128xf32>
    %c64_i32_6 = arith.constant 64 : i32
    %46 = tpu.dynamic_rotate %45 by %c64_i32_6 dim 1 : vector<1x128xf32>, i32 -> vector<1x128xf32>
    %47 = arith.addf %45, %46 : vector<1x128xf32>
    %cst_7 = arith.constant 3.200000e+01 : f32
    %48 = vector.broadcast %cst_7 : f32 to vector<1x128xf32>
    %49 = arith.divf %47, %48 : vector<1x128xf32>
    %c0_8 = arith.constant 0 : index
    %c0_9 = arith.constant 0 : index
    %50 = vector.load %arg6[%c0_8, %c0_9] : memref<8x128xf32, #tpu.memory_space<vmem>>, vector<1x128xf32>
    %cst_10 = arith.constant 9.99999974E-6 : f32
    %51 = vector.broadcast %cst_10 : f32 to vector<1x128xf32>
    %52 = arith.addf %49, %51 : vector<1x128xf32>
    %53 = math.rsqrt %52 : vector<1x128xf32>
    %54 = arith.mulf %50, %53 : vector<1x128xf32>
    %55 = tpu.concatenate %54, %54, %54, %54, %54, %54, %54, %54 in 1 : vector<1x128xf32>, vector<1x128xf32>, vector<1x128xf32>, vector<1x128xf32>, vector<1x128xf32>, vector<1x128xf32>, vector<1x128xf32>, vector<1x128xf32> -> vector<1x1024xf32>
    %56 = vector.broadcast %55 : vector<1x1024xf32> to vector<2x1024xf32>
    %57 = arith.mulf %27, %56 : vector<2x1024xf32>
    %c1 = arith.constant 1 : index
    %c0_11 = arith.constant 0 : index
    %58 = vector.load %arg6[%c1, %c0_11] : memref<8x128xf32, #tpu.memory_space<vmem>>, vector<1x128xf32>
    %59 = tpu.concatenate %58, %58, %58, %58, %58, %58, %58, %58 in 1 : vector<1x128xf32>, vector<1x128xf32>, vector<1x128xf32>, vector<1x128xf32>, vector<1x128xf32>, vector<1x128xf32>, vector<1x128xf32>, vector<1x128xf32> -> vector<1x1024xf32>
    %60 = vector.broadcast %59 : vector<1x1024xf32> to vector<2x1024xf32>
    %61 = arith.addf %57, %60 : vector<2x1024xf32>
    %cst_12 = arith.constant 0.000000e+00 : f32
    %62 = vector.broadcast %cst_12 : f32 to vector<2x1024xf32>
    %63 = arith.cmpf oge, %61, %62 : vector<2x1024xf32>
    %cst_13 = arith.constant 0.00999999977 : f32
    %64 = vector.broadcast %cst_13 : f32 to vector<2x1024xf32>
    %65 = arith.mulf %64, %61 : vector<2x1024xf32>
    %66 = arith.select %63, %61, %65 : vector<2x1024xi1>, vector<2x1024xf32>
    %67 = arith.truncf %66 : vector<2x1024xf32> to vector<2x1024xbf16>
    %68 = vector.extract_strided_slice %67 {offsets = [0, 0], sizes = [2, 192], strides = [1, 1]} : vector<2x1024xbf16> to vector<2x192xbf16>
    %69 = vector.extract_strided_slice %67 {offsets = [0, 128], sizes = [2, 192], strides = [1, 1]} : vector<2x1024xbf16> to vector<2x192xbf16>
    %70 = vector.extract_strided_slice %67 {offsets = [0, 256], sizes = [2, 192], strides = [1, 1]} : vector<2x1024xbf16> to vector<2x192xbf16>
    %71 = vector.extract_strided_slice %67 {offsets = [0, 384], sizes = [2, 192], strides = [1, 1]} : vector<2x1024xbf16> to vector<2x192xbf16>
    %72 = vector.extract_strided_slice %67 {offsets = [0, 512], sizes = [2, 192], strides = [1, 1]} : vector<2x1024xbf16> to vector<2x192xbf16>
    %73 = vector.extract_strided_slice %67 {offsets = [0, 640], sizes = [2, 192], strides = [1, 1]} : vector<2x1024xbf16> to vector<2x192xbf16>
    %74 = vector.extract_strided_slice %67 {offsets = [0, 768], sizes = [2, 192], strides = [1, 1]} : vector<2x1024xbf16> to vector<2x192xbf16>
    %75 = tpu.concatenate %68, %69, %70, %71, %72, %73, %74 in 0 : vector<2x192xbf16>, vector<2x192xbf16>, vector<2x192xbf16>, vector<2x192xbf16>, vector<2x192xbf16>, vector<2x192xbf16>, vector<2x192xbf16> -> vector<14x192xbf16>
    %c0_14 = arith.constant 0 : index
    %c0_15 = arith.constant 0 : index
    %76 = vector.load %arg2[%c0_14, %c0_15] : memref<192x64xbf16, #tpu.memory_space<vmem>>, vector<192x64xbf16>
    %cst_16 = arith.constant dense<0.000000e+00> : vector<14x64xf32>
    %77 = tpu.matmul %75, %76, %cst_16 {dimension_numbers = #tpu.dot_dimension_numbers<[1], [0], [0], [1], [0, 0, 1, 1], [], []>} : vector<14x192xbf16>, vector<192x64xbf16>, vector<14x64xf32> -> vector<14x64xf32>
    %cst_17 = arith.constant dense<0.000000e+00> : vector<64xf32>
    %78 = vector.multi_reduction <add>, %77, %cst_17 [0] : vector<14x64xf32> to vector<64xf32>
    %79 = vector.shape_cast %78 : vector<64xf32> to vector<1x64xf32>
    %cst_18 = arith.constant 1.400000e+01 : f32
    %80 = vector.broadcast %cst_18 : f32 to vector<1x64xf32>
    %81 = arith.divf %79, %80 : vector<1x64xf32>
    %82 = vector.broadcast %81 : vector<1x64xf32> to vector<14x64xf32>
    %83 = arith.subf %77, %82 : vector<14x64xf32>
    %84 = arith.mulf %83, %83 : vector<14x64xf32>
    %cst_19 = arith.constant dense<0.000000e+00> : vector<64xf32>
    %85 = vector.multi_reduction <add>, %84, %cst_19 [0] : vector<14x64xf32> to vector<64xf32>
    %86 = vector.shape_cast %85 : vector<64xf32> to vector<1x64xf32>
    %cst_20 = arith.constant 1.400000e+01 : f32
    %87 = vector.broadcast %cst_20 : f32 to vector<1x64xf32>
    %88 = arith.divf %86, %87 : vector<1x64xf32>
    %c2 = arith.constant 2 : index
    %c0_21 = arith.constant 0 : index
    %89 = vector.load %arg6[%c2, %c0_21] : memref<8x128xf32, #tpu.memory_space<vmem>>, vector<1x64xf32>
    %cst_22 = arith.constant 9.99999974E-6 : f32
    %90 = vector.broadcast %cst_22 : f32 to vector<1x64xf32>
    %91 = arith.addf %88, %90 : vector<1x64xf32>
    %92 = math.rsqrt %91 : vector<1x64xf32>
    %93 = arith.mulf %89, %92 : vector<1x64xf32>
    %94 = vector.broadcast %93 : vector<1x64xf32> to vector<14x64xf32>
    %95 = arith.mulf %83, %94 : vector<14x64xf32>
    %c3 = arith.constant 3 : index
    %c0_23 = arith.constant 0 : index
    %96 = vector.load %arg6[%c3, %c0_23] : memref<8x128xf32, #tpu.memory_space<vmem>>, vector<1x64xf32>
    %97 = vector.broadcast %96 : vector<1x64xf32> to vector<14x64xf32>
    %98 = arith.addf %95, %97 : vector<14x64xf32>
    %cst_24 = arith.constant 0.000000e+00 : f32
    %99 = vector.broadcast %cst_24 : f32 to vector<14x64xf32>
    %100 = arith.cmpf oge, %98, %99 : vector<14x64xf32>
    %cst_25 = arith.constant 0.00999999977 : f32
    %101 = vector.broadcast %cst_25 : f32 to vector<14x64xf32>
    %102 = arith.mulf %101, %98 : vector<14x64xf32>
    %103 = arith.select %100, %98, %102 : vector<14x64xi1>, vector<14x64xf32>
    %104 = arith.truncf %103 : vector<14x64xf32> to vector<14x64xbf16>
    %105 = vector.extract_strided_slice %104 {offsets = [0, 0], sizes = [2, 64], strides = [1, 1]} : vector<14x64xbf16> to vector<2x64xbf16>
    %c0_26 = arith.constant 0 : index
    %c0_27 = arith.constant 0 : index
    %106 = vector.load %arg3[%c0_26, %c0_27] : memref<448x64xbf16, #tpu.memory_space<vmem>>, vector<64x64xbf16>
    %cst_28 = arith.constant dense<0.000000e+00> : vector<2x64xf32>
    %107 = tpu.matmul %105, %106, %cst_28 {dimension_numbers = #tpu.dot_dimension_numbers<[1], [0], [0], [1], [0, 0, 1, 1], [], []>} : vector<2x64xbf16>, vector<64x64xbf16>, vector<2x64xf32> -> vector<2x64xf32>
    %108 = vector.extract_strided_slice %104 {offsets = [2, 0], sizes = [2, 64], strides = [1, 1]} : vector<14x64xbf16> to vector<2x64xbf16>
    %c64 = arith.constant 64 : index
    %c0_29 = arith.constant 0 : index
    %109 = vector.load %arg3[%c64, %c0_29] : memref<448x64xbf16, #tpu.memory_space<vmem>>, vector<64x64xbf16>
    %cst_30 = arith.constant dense<0.000000e+00> : vector<2x64xf32>
    %110 = tpu.matmul %108, %109, %cst_30 {dimension_numbers = #tpu.dot_dimension_numbers<[1], [0], [0], [1], [0, 0, 1, 1], [], []>} : vector<2x64xbf16>, vector<64x64xbf16>, vector<2x64xf32> -> vector<2x64xf32>
    %111 = arith.addf %107, %110 : vector<2x64xf32>
    %112 = vector.extract_strided_slice %104 {offsets = [4, 0], sizes = [2, 64], strides = [1, 1]} : vector<14x64xbf16> to vector<2x64xbf16>
    %c128 = arith.constant 128 : index
    %c0_31 = arith.constant 0 : index
    %113 = vector.load %arg3[%c128, %c0_31] : memref<448x64xbf16, #tpu.memory_space<vmem>>, vector<64x64xbf16>
    %cst_32 = arith.constant dense<0.000000e+00> : vector<2x64xf32>
    %114 = tpu.matmul %112, %113, %cst_32 {dimension_numbers = #tpu.dot_dimension_numbers<[1], [0], [0], [1], [0, 0, 1, 1], [], []>} : vector<2x64xbf16>, vector<64x64xbf16>, vector<2x64xf32> -> vector<2x64xf32>
    %115 = arith.addf %111, %114 : vector<2x64xf32>
    %116 = vector.extract_strided_slice %104 {offsets = [6, 0], sizes = [2, 64], strides = [1, 1]} : vector<14x64xbf16> to vector<2x64xbf16>
    %c192 = arith.constant 192 : index
    %c0_33 = arith.constant 0 : index
    %117 = vector.load %arg3[%c192, %c0_33] : memref<448x64xbf16, #tpu.memory_space<vmem>>, vector<64x64xbf16>
    %cst_34 = arith.constant dense<0.000000e+00> : vector<2x64xf32>
    %118 = tpu.matmul %116, %117, %cst_34 {dimension_numbers = #tpu.dot_dimension_numbers<[1], [0], [0], [1], [0, 0, 1, 1], [], []>} : vector<2x64xbf16>, vector<64x64xbf16>, vector<2x64xf32> -> vector<2x64xf32>
    %119 = arith.addf %115, %118 : vector<2x64xf32>
    %120 = vector.extract_strided_slice %104 {offsets = [8, 0], sizes = [2, 64], strides = [1, 1]} : vector<14x64xbf16> to vector<2x64xbf16>
    %c256 = arith.constant 256 : index
    %c0_35 = arith.constant 0 : index
    %121 = vector.load %arg3[%c256, %c0_35] : memref<448x64xbf16, #tpu.memory_space<vmem>>, vector<64x64xbf16>
    %cst_36 = arith.constant dense<0.000000e+00> : vector<2x64xf32>
    %122 = tpu.matmul %120, %121, %cst_36 {dimension_numbers = #tpu.dot_dimension_numbers<[1], [0], [0], [1], [0, 0, 1, 1], [], []>} : vector<2x64xbf16>, vector<64x64xbf16>, vector<2x64xf32> -> vector<2x64xf32>
    %123 = arith.addf %119, %122 : vector<2x64xf32>
    %124 = vector.extract_strided_slice %104 {offsets = [10, 0], sizes = [2, 64], strides = [1, 1]} : vector<14x64xbf16> to vector<2x64xbf16>
    %c320 = arith.constant 320 : index
    %c0_37 = arith.constant 0 : index
    %125 = vector.load %arg3[%c320, %c0_37] : memref<448x64xbf16, #tpu.memory_space<vmem>>, vector<64x64xbf16>
    %cst_38 = arith.constant dense<0.000000e+00> : vector<2x64xf32>
    %126 = tpu.matmul %124, %125, %cst_38 {dimension_numbers = #tpu.dot_dimension_numbers<[1], [0], [0], [1], [0, 0, 1, 1], [], []>} : vector<2x64xbf16>, vector<64x64xbf16>, vector<2x64xf32> -> vector<2x64xf32>
    %127 = arith.addf %123, %126 : vector<2x64xf32>
    %128 = vector.extract_strided_slice %104 {offsets = [12, 0], sizes = [2, 64], strides = [1, 1]} : vector<14x64xbf16> to vector<2x64xbf16>
    %c384 = arith.constant 384 : index
    %c0_39 = arith.constant 0 : index
    %129 = vector.load %arg3[%c384, %c0_39] : memref<448x64xbf16, #tpu.memory_space<vmem>>, vector<64x64xbf16>
    %cst_40 = arith.constant dense<0.000000e+00> : vector<2x64xf32>
    %130 = tpu.matmul %128, %129, %cst_40 {dimension_numbers = #tpu.dot_dimension_numbers<[1], [0], [0], [1], [0, 0, 1, 1], [], []>} : vector<2x64xbf16>, vector<64x64xbf16>, vector<2x64xf32> -> vector<2x64xf32>
    %131 = arith.addf %127, %130 : vector<2x64xf32>
    %c4 = arith.constant 4 : index
    %c0_41 = arith.constant 0 : index
    %132 = vector.load %arg6[%c4, %c0_41] : memref<8x128xf32, #tpu.memory_space<vmem>>, vector<1x64xf32>
    %133 = vector.broadcast %132 : vector<1x64xf32> to vector<2x64xf32>
    %134 = arith.addf %131, %133 : vector<2x64xf32>
    %cst_42 = arith.constant 0.000000e+00 : f32
    %135 = vector.broadcast %cst_42 : f32 to vector<2x64xf32>
    %136 = arith.maximumf %134, %135 : vector<2x64xf32>
    %137 = arith.truncf %136 : vector<2x64xf32> to vector<2x64xbf16>
    %c0_43 = arith.constant 0 : index
    %c0_44 = arith.constant 0 : index
    %138 = vector.load %arg4[%c0_43, %c0_44] : memref<64x32xbf16, #tpu.memory_space<vmem>>, vector<64x32xbf16>
    %cst_45 = arith.constant dense<0.000000e+00> : vector<2x32xf32>
    %139 = tpu.matmul %137, %138, %cst_45 {dimension_numbers = #tpu.dot_dimension_numbers<[1], [0], [0], [1], [0, 0, 1, 1], [], []>} : vector<2x64xbf16>, vector<64x32xbf16>, vector<2x32xf32> -> vector<2x32xf32>
    %c5 = arith.constant 5 : index
    %c0_46 = arith.constant 0 : index
    %140 = vector.load %arg6[%c5, %c0_46] : memref<8x128xf32, #tpu.memory_space<vmem>>, vector<1x32xf32>
    %141 = vector.broadcast %140 : vector<1x32xf32> to vector<2x32xf32>
    %142 = arith.addf %139, %141 : vector<2x32xf32>
    %cst_47 = arith.constant 0.000000e+00 : f32
    %143 = vector.broadcast %cst_47 : f32 to vector<2x32xf32>
    %144 = arith.maximumf %142, %143 : vector<2x32xf32>
    %145 = arith.truncf %144 : vector<2x32xf32> to vector<2x32xbf16>
    %c0_48 = arith.constant 0 : index
    %c0_49 = arith.constant 0 : index
    %146 = vector.load %arg5[%c0_48, %c0_49] : memref<32x1xbf16, #tpu.memory_space<vmem>>, vector<32x1xbf16>
    %cst_50 = arith.constant dense<0.000000e+00> : vector<2x1xf32>
    %147 = tpu.matmul %145, %146, %cst_50 {dimension_numbers = #tpu.dot_dimension_numbers<[1], [0], [0], [1], [0, 0, 1, 1], [], []>} : vector<2x32xbf16>, vector<32x1xbf16>, vector<2x1xf32> -> vector<2x1xf32>
    %c6 = arith.constant 6 : index
    %c0_51 = arith.constant 0 : index
    %148 = vector.load %arg6[%c6, %c0_51] : memref<8x128xf32, #tpu.memory_space<vmem>>, vector<1x1xf32>
    %149 = vector.broadcast %148 : vector<1x1xf32> to vector<2x1xf32>
    %150 = arith.addf %147, %149 : vector<2x1xf32>
    %151 = math.absf %150 : vector<2x1xf32>
    %cst_52 = arith.constant 0.000000e+00 : f32
    %152 = vector.broadcast %cst_52 : f32 to vector<2x1xf32>
    %153 = arith.subf %152, %151 : vector<2x1xf32>
    %154 = math.exp %153 : vector<2x1xf32>
    %cst_53 = arith.constant 0.000000e+00 : f32
    %155 = vector.broadcast %cst_53 : f32 to vector<2x1xf32>
    %156 = arith.cmpf oge, %150, %155 : vector<2x1xf32>
    %cst_54 = arith.constant 1.000000e+00 : f32
    %157 = vector.broadcast %cst_54 : f32 to vector<2x1xf32>
    %158 = arith.addf %157, %154 : vector<2x1xf32>
    %cst_55 = arith.constant 1.000000e+00 : f32
    %159 = vector.broadcast %cst_55 : f32 to vector<2x1xf32>
    %160 = arith.divf %159, %158 : vector<2x1xf32>
    %cst_56 = arith.constant 1.000000e+00 : f32
    %161 = vector.broadcast %cst_56 : f32 to vector<2x1xf32>
    %162 = arith.addf %161, %154 : vector<2x1xf32>
    %163 = arith.divf %154, %162 : vector<2x1xf32>
    %164 = arith.select %156, %160, %163 : vector<2x1xi1>, vector<2x1xf32>
    %c0_57 = arith.constant 0 : index
    %c0_58 = arith.constant 0 : index
    %165 = vector.load %arg7[%c0_57, %c0_58] : memref<2x1xf32, #tpu.memory_space<vmem>>, vector<2x1xf32>
    tpu.vector_store %arg7[%c0_57, %c0_58], %164 {strides = array<i32>} : memref<2x1xf32, #tpu.memory_space<vmem>>, vector<2x1xf32>,
    return
  }
}

</mosaic_0001>

<llo_original>
// kernel: critic_forward.1
$region0: #{critic_forward.1}
  #allocation0 [shape = 'u32[]', space=smem, size = 0x4, offset = 0x4, fixed_abs, tag = 'smem constant byte address 0x4 - core index']
  #allocation1 [shape = 'u32[144,128]{1,0:T(1,128)}', space=vmem, size = 0x12000, scoped, tag = 'internal scratch']
  %s0 = inlined_call_operand.vmem [shape: f32[2,60], index: 0, kind: input, shape index: {}]
  %s1 = inlined_call_operand.vmem [shape: bf16[60,1024], index: 1, kind: input, shape index: {}]
  %s2 = inlined_call_operand.vmem [shape: bf16[192,64], index: 2, kind: input, shape index: {}]
  %s3 = inlined_call_operand.vmem [shape: bf16[448,64], index: 3, kind: input, shape index: {}]
  %s4 = inlined_call_operand.vmem [shape: bf16[64,32], index: 4, kind: input, shape index: {}]
  %s5 = inlined_call_operand.vmem [shape: bf16[32,1], index: 5, kind: input, shape index: {}]
  %s6 = inlined_call_operand.vmem [shape: f32[8,128], index: 6, kind: input, shape index: {}]
  %s7 = inlined_call_operand.vmem [shape: f32[2,1], index: 7, kind: output, shape index: {}]
  %s8 = sld [smem:[#allocation0]]
  $region38: #{critic_forward.1} parent=0
    _
  %s10 = ssub.s32 1, %s8
  %s11 = scalar_select 0, %s10, %s8
  // Predicated region
  $region2: #{critic_forward.1} parent=0 // pred_check
    _
  $region3: #{critic_forward.1} parent=0 // pred_check_branch
    %13 = sbr.rel (0) target = $region5
  $region4: #{critic_forward.1} parent=0 // pred_region
    _
  $region5: #{critic_forward.1} parent=0 // pred_fallthru
    _
  // Predicated region
  $region6: #{critic_forward.1} parent=0 // pred_check
    _
  $region7: #{critic_forward.1} parent=0 // pred_check_branch
    %15 = sbr.rel (0) target = $region9
  $region8: #{critic_forward.1} parent=0 // pred_region
    _
  $region9: #{critic_forward.1} parent=0 // pred_fallthru
    _
  // Predicated region
  $region10: #{critic_forward.1} parent=0 // pred_check
    _
  $region11: #{critic_forward.1} parent=0 // pred_check_branch
    %17 = sbr.rel (0) target = $region13
  $region12: #{critic_forward.1} parent=0 // pred_region
    _
  $region13: #{critic_forward.1} parent=0 // pred_fallthru
    _
  // Predicated region
  $region14: #{critic_forward.1} parent=0 // pred_check
    _
  $region15: #{critic_forward.1} parent=0 // pred_check_branch
    %19 = sbr.rel (0) target = $region17
  $region16: #{critic_forward.1} parent=0 // pred_region
    _
  $region17: #{critic_forward.1} parent=0 // pred_fallthru
    _
  // Predicated region
  $region18: #{critic_forward.1} parent=0 // pred_check
    _
  $region19: #{critic_forward.1} parent=0 // pred_check_branch
    %21 = sbr.rel (0) target = $region21
  $region20: #{critic_forward.1} parent=0 // pred_region
    _
  $region21: #{critic_forward.1} parent=0 // pred_fallthru
    _
  // Predicated region
  $region22: #{critic_forward.1} parent=0 // pred_check
    _
  $region23: #{critic_forward.1} parent=0 // pred_check_branch
    %23 = sbr.rel (0) target = $region25
  $region24: #{critic_forward.1} parent=0 // pred_region
    _
  $region25: #{critic_forward.1} parent=0 // pred_fallthru
    _
  // Predicated region
  $region26: #{critic_forward.1} parent=0 // pred_check
    _
  $region27: #{critic_forward.1} parent=0 // pred_check_branch
    %25 = sbr.rel (0) target = $region29
  $region28: #{critic_forward.1} parent=0 // pred_region
    _
  $region29: #{critic_forward.1} parent=0 // pred_fallthru
    _
  %v27 = vld [vmem:[%s0] sm:$0x3]
  %v28 = vpack.c.bf16 %v27, %v27
  %v29 = vld [vmem:[%s1] sm:$0xff]
  %v30 = vld [vmem:[%s1 + $0x8] sm:$0xff]
  %v31 = vld [vmem:[%s1 + $0x10] sm:$0xff]
  %v32 = vld [vmem:[%s1 + $0x18] sm:$0xff]
  %v33 = vld [vmem:[%s1 + $0x20] sm:$0xff]
  %v34 = vld [vmem:[%s1 + $0x28] sm:$0xff]
  %v35 = vld [vmem:[%s1 + $0x30] sm:$0xff]
  %v36 = vld [vmem:[%s1 + $0x38] sm:$0xff]
  %v37 = vld [vmem:[%s1 + $0x40] sm:$0xff]
  %v38 = vld [vmem:[%s1 + $0x48] sm:$0xff]
  %v39 = vld [vmem:[%s1 + $0x50] sm:$0xff]
  %v40 = vld [vmem:[%s1 + $0x58] sm:$0xff]
  %v41 = vld [vmem:[%s1 + $0x60] sm:$0xff]
  %v42 = vld [vmem:[%s1 + $0x68] sm:$0xff]
  %v43 = vld [vmem:[%s1 + $0x70] sm:$0xff]
  %v44 = vld [vmem:[%s1 + $0x78] sm:$0xff]
  %v45 = vld [vmem:[%s1 + $0x80] sm:$0xff]
  %v46 = vld [vmem:[%s1 + $0x88] sm:$0xff]
  %v47 = vld [vmem:[%s1 + $0x90] sm:$0xff]
  %v48 = vld [vmem:[%s1 + $0x98] sm:$0xff]
  %v49 = vld [vmem:[%s1 + $0xa0] sm:$0xff]
  %v50 = vld [vmem:[%s1 + $0xa8] sm:$0xff]
  %v51 = vld [vmem:[%s1 + $0xb0] sm:$0xff]
  %v52 = vld [vmem:[%s1 + $0xb8] sm:$0xff]
  %v53 = vld [vmem:[%s1 + $0xc0] sm:$0xff]
  %v54 = vld [vmem:[%s1 + $0xc8] sm:$0xff]
  %v55 = vld [vmem:[%s1 + $0xd0] sm:$0xff]
  %v56 = vld [vmem:[%s1 + $0xd8] sm:$0xff]
  %v57 = vld [vmem:[%s1 + $0xe0] sm:$0x33]
  %v58 = vld [vmem:[%s1 + $0xe8] sm:$0x33]
  %v59 = vld [vmem:[%s1 + $0xf0] sm:$0x33]
  %v60 = vld [vmem:[%s1 + $0xf8] sm:$0x33]
  %v93 = vunpack.c.l.b16 %v29
  %v94 = vunpack.c.h.b16 %v29
  %v95 = vunpack.c.l.b16 %v30
  %v96 = vunpack.c.h.b16 %v30
  %v97 = vunpack.c.l.b16 %v31
  %v98 = vunpack.c.h.b16 %v31
  %v99 = vunpack.c.l.b16 %v32
  %v100 = vunpack.c.h.b16 %v32
  %v101 = vunpack.c.l.b16 %v33
  %v102 = vunpack.c.h.b16 %v33
  %v103 = vunpack.c.l.b16 %v34
  %v104 = vunpack.c.h.b16 %v34
  %v105 = vunpack.c.l.b16 %v35
  %v106 = vunpack.c.h.b16 %v35
  %v107 = vunpack.c.l.b16 %v36
  %v108 = vunpack.c.h.b16 %v36
  %v109 = vunpack.c.l.b16 %v37
  %v110 = vunpack.c.h.b16 %v37
  %v111 = vunpack.c.l.b16 %v38
  %v112 = vunpack.c.h.b16 %v38
  %v113 = vunpack.c.l.b16 %v39
  %v114 = vunpack.c.h.b16 %v39
  %v115 = vunpack.c.l.b16 %v40
  %v116 = vunpack.c.h.b16 %v40
  %v117 = vunpack.c.l.b16 %v41
  %v118 = vunpack.c.h.b16 %v41
  %v119 = vunpack.c.l.b16 %v42
  %v120 = vunpack.c.h.b16 %v42
  %v121 = vunpack.c.l.b16 %v43
  %v122 = vunpack.c.h.b16 %v43
  %v123 = vunpack.c.l.b16 %v44
  %v124 = vunpack.c.h.b16 %v44
  %v125 = vunpack.c.l.b16 %v45
  %v126 = vunpack.c.h.b16 %v45
  %v127 = vunpack.c.l.b16 %v46
  %v128 = vunpack.c.h.b16 %v46
  %v129 = vunpack.c.l.b16 %v47
  %v130 = vunpack.c.h.b16 %v47
  %v131 = vunpack.c.l.b16 %v48
  %v132 = vunpack.c.h.b16 %v48
  %v133 = vunpack.c.l.b16 %v49
  %v134 = vunpack.c.h.b16 %v49
  %v135 = vunpack.c.l.b16 %v50
  %v136 = vunpack.c.h.b16 %v50
  %v137 = vunpack.c.l.b16 %v51
  %v138 = vunpack.c.h.b16 %v51
  %v139 = vunpack.c.l.b16 %v52
  %v140 = vunpack.c.h.b16 %v52
  %v141 = vunpack.c.l.b16 %v53
  %v142 = vunpack.c.h.b16 %v53
  %v143 = vunpack.c.l.b16 %v54
  %v144 = vunpack.c.h.b16 %v54
  %v145 = vunpack.c.l.b16 %v55
  %v146 = vunpack.c.h.b16 %v55
  %v147 = vunpack.c.l.b16 %v56
  %v148 = vunpack.c.h.b16 %v56
  %v149 = vunpack.c.l.b16 %v57
  %v150 = vunpack.c.h.b16 %v57
  %v151 = vunpack.c.l.b16 %v58
  %v152 = vunpack.c.h.b16 %v58
  %v153 = vunpack.c.l.b16 %v59
  %v154 = vunpack.c.h.b16 %v59
  %v155 = vunpack.c.l.b16 %v60
  %v156 = vunpack.c.h.b16 %v60
  %v157 = vpack.c.b16 %v101, %v93
  %v158 = vpack.c.b16 %v102, %v94
  %v159 = vpack.c.b16 %v103, %v95
  %v160 = vpack.c.b16 %v104, %v96
  %v161 = vpack.c.b16 %v105, %v97
  %v162 = vpack.c.b16 %v106, %v98
  %v163 = vpack.c.b16 %v107, %v99
  %v164 = vpack.c.b16 %v108, %v100
  %v165 = vpack.c.b16 %v117, %v109
  %v166 = vpack.c.b16 %v118, %v110
  %v167 = vpack.c.b16 %v119, %v111
  %v168 = vpack.c.b16 %v120, %v112
  %v169 = vpack.c.b16 %v121, %v113
  %v170 = vpack.c.b16 %v122, %v114
  %v171 = vpack.c.b16 %v123, %v115
  %v172 = vpack.c.b16 %v124, %v116
  %v173 = vpack.c.b16 %v133, %v125
  %v174 = vpack.c.b16 %v134, %v126
  %v175 = vpack.c.b16 %v135, %v127
  %v176 = vpack.c.b16 %v136, %v128
  %v177 = vpack.c.b16 %v137, %v129
  %v178 = vpack.c.b16 %v138, %v130
  %v179 = vpack.c.b16 %v139, %v131
  %v180 = vpack.c.b16 %v140, %v132
  %v181 = vpack.c.b16 %v149, %v141
  %v182 = vpack.c.b16 %v150, %v142
  %v183 = vpack.c.b16 %v151, %v143
  %v184 = vpack.c.b16 %v152, %v144
  %v185 = vpack.c.b16 %v153, %v145
  %v186 = vpack.c.b16 %v154, %v146
  %v187 = vpack.c.b16 %v155, %v147
  %v188 = vpack.c.b16 %v156, %v148
  %vm213 = vcmask 490496
  %v215 = vsel %vm213, %v28, 0
  %vm217 = vcmask 1045504
  %v219 = vsel %vm217, %v181, 0
  %v222 = vsel %vm217, %v182, 0
  %v225 = vsel %vm217, %v183, 0
  %v228 = vsel %vm217, %v184, 0
  %v231 = vsel %vm217, %v185, 0
  %v234 = vsel %vm217, %v186, 0
  %v237 = vsel %vm217, %v187, 0
  %v240 = vsel %vm217, %v188, 0
  %242 = vmatprep.subr.bf16.mxu0 %v158
  %243 = vmatpush1.bf16.msra.mxu0 %v157
  %244 = vmatprep.subr.bf16.mxu0 %v166
  %245 = vmatpush1.bf16.msra.mxu0 %v165
  %246 = vmatprep.subr.bf16.mxu0 %v174
  %247 = vmatpush1.bf16.msra.mxu0 %v173
  %248 = vmatprep.subr.bf16.mxu0 %v222
  %249 = vmatpush1.bf16.msra.mxu0 %v219
  %250 = vmatprep.subr.bf16.mxu0 0
  %251 = vmatpush1.bf16.msra.mxu0 0
  %252 = vmatprep.subr.bf16.mxu0 0
  %253 = vmatpush1.bf16.msra.mxu0 0
  %254 = vmatprep.subr.bf16.mxu0 0
  %255 = vmatpush1.bf16.msra.mxu0 0
  %256 = vmatprep.subr.bf16.mxu0 0
  %257 = vmatpush1.bf16.msra.mxu0 0
  %258 = vmatprep.subr.bf16.mxu0 0
  %259 = vmatpush1.bf16.msra.mxu0 0
  %260 = vmatprep.subr.bf16.mxu0 0
  %261 = vmatpush1.bf16.msra.mxu0 0
  %262 = vmatprep.subr.bf16.mxu0 0
  %263 = vmatpush1.bf16.msra.mxu0 0
  %264 = vmatprep.subr.bf16.mxu0 0
  %265 = vmatpush1.bf16.msra.mxu0 0
  %266 = vmatprep.subr.bf16.mxu0 0
  %267 = vmatpush1.bf16.msra.mxu0 0
  %268 = vmatprep.subr.bf16.mxu0 0
  %269 = vmatpush1.bf16.msra.mxu0 0
  %270 = vmatprep.subr.bf16.mxu0 0
  %271 = vmatpush1.bf16.msra.mxu0 0
  %272 = vmatprep.subr.bf16.mxu0 0
  %273 = vmatpush1.bf16.msra.mxu0 0
  %274 = vmatprep.mubr.bf16.mxu0 0
  %275 = vmatmul.mubr.bf16.gmra.mrb[0].mxu0 %v215
  %v276 = vpop.f32.mrb[0].mxu0
  %v277 = vadd.f32 0.0, %v276
  %v278 = vpop.f32.mrb[0].mxu0
  %v279 = vadd.f32 0.0, %v278
  %v280 = vpop.f32.mrb[0].mxu0
  %v281 = vpop.f32.mrb[0].mxu0
  %282 = vdwg.mxu0
  %283 = vmatprep.subr.bf16.mxu0 %v160
  %284 = vmatpush1.bf16.msra.mxu0 %v159
  %285 = vmatprep.subr.bf16.mxu0 %v168
  %286 = vmatpush1.bf16.msra.mxu0 %v167
  %287 = vmatprep.subr.bf16.mxu0 %v176
  %288 = vmatpush1.bf16.msra.mxu0 %v175
  %289 = vmatprep.subr.bf16.mxu0 %v228
  %290 = vmatpush1.bf16.msra.mxu0 %v225
  %291 = vmatprep.subr.bf16.mxu0 0
  %292 = vmatpush1.bf16.msra.mxu0 0
  %293 = vmatprep.subr.bf16.mxu0 0
  %294 = vmatpush1.bf16.msra.mxu0 0
  %295 = vmatprep.subr.bf16.mxu0 0
  %296 = vmatpush1.bf16.msra.mxu0 0
  %297 = vmatprep.subr.bf16.mxu0 0
  %298 = vmatpush1.bf16.msra.mxu0 0
  %299 = vmatprep.subr.bf16.mxu0 0
  %300 = vmatpush1.bf16.msra.mxu0 0
  %301 = vmatprep.subr.bf16.mxu0 0
  %302 = vmatpush1.bf16.msra.mxu0 0
  %303 = vmatprep.subr.bf16.mxu0 0
  %304 = vmatpush1.bf16.msra.mxu0 0
  %305 = vmatprep.subr.bf16.mxu0 0
  %306 = vmatpush1.bf16.msra.mxu0 0
  %307 = vmatprep.subr.bf16.mxu0 0
  %308 = vmatpush1.bf16.msra.mxu0 0
  %309 = vmatprep.subr.bf16.mxu0 0
  %310 = vmatpush1.bf16.msra.mxu0 0
  %311 = vmatprep.subr.bf16.mxu0 0
  %312 = vmatpush1.bf16.msra.mxu0 0
  %313 = vmatprep.subr.bf16.mxu0 0
  %314 = vmatpush1.bf16.msra.mxu0 0
  %315 = vmatprep.mubr.bf16.mxu0 0
  %316 = vmatmul.mubr.bf16.gmra.mrb[0].mxu0 %v215
  %v317 = vpop.f32.mrb[0].mxu0
  %v318 = vadd.f32 0.0, %v317
  %v319 = vpop.f32.mrb[0].mxu0
  %v320 = vadd.f32 0.0, %v319
  %v321 = vpop.f32.mrb[0].mxu0
  %v322 = vpop.f32.mrb[0].mxu0
  %323 = vdwg.mxu0
  %324 = vmatprep.subr.bf16.mxu0 %v162
  %325 = vmatpush1.bf16.msra.mxu0 %v161
  %326 = vmatprep.subr.bf16.mxu0 %v170
  %327 = vmatpush1.bf16.msra.mxu0 %v169
  %328 = vmatprep.subr.bf16.mxu0 %v178
  %329 = vmatpush1.bf16.msra.mxu0 %v177
  %330 = vmatprep.subr.bf16.mxu0 %v234
  %331 = vmatpush1.bf16.msra.mxu0 %v231
  %332 = vmatprep.subr.bf16.mxu0 0
  %333 = vmatpush1.bf16.msra.mxu0 0
  %334 = vmatprep.subr.bf16.mxu0 0
  %335 = vmatpush1.bf16.msra.mxu0 0
  %336 = vmatprep.subr.bf16.mxu0 0
  %337 = vmatpush1.bf16.msra.mxu0 0
  %338 = vmatprep.subr.bf16.mxu0 0
  %339 = vmatpush1.bf16.msra.mxu0 0
  %340 = vmatprep.subr.bf16.mxu0 0
  %341 = vmatpush1.bf16.msra.mxu0 0
  %342 = vmatprep.subr.bf16.mxu0 0
  %343 = vmatpush1.bf16.msra.mxu0 0
  %344 = vmatprep.subr.bf16.mxu0 0
  %345 = vmatpush1.bf16.msra.mxu0 0
  %346 = vmatprep.subr.bf16.mxu0 0
  %347 = vmatpush1.bf16.msra.mxu0 0
  %348 = vmatprep.subr.bf16.mxu0 0
  %349 = vmatpush1.bf16.msra.mxu0 0
  %350 = vmatprep.subr.bf16.mxu0 0
  %351 = vmatpush1.bf16.msra.mxu0 0
  %352 = vmatprep.subr.bf16.mxu0 0
  %353 = vmatpush1.bf16.msra.mxu0 0
  %354 = vmatprep.subr.bf16.mxu0 0
  %355 = vmatpush1.bf16.msra.mxu0 0
  %356 = vmatprep.mubr.bf16.mxu0 0
  %357 = vmatmul.mubr.bf16.gmra.mrb[0].mxu0 %v215
  %v358 = vpop.f32.mrb[0].mxu0
  %v359 = vadd.f32 0.0, %v358
  %v360 = vpop.f32.mrb[0].mxu0
  %v361 = vadd.f32 0.0, %v360
  %v362 = vpop.f32.mrb[0].mxu0
  %v363 = vpop.f32.mrb[0].mxu0
  %364 = vdwg.mxu0
  %365 = vmatprep.subr.bf16.mxu0 %v164
  %366 = vmatpush1.bf16.msra.mxu0 %v163
  %367 = vmatprep.subr.bf16.mxu0 %v172
  %368 = vmatpush1.bf16.msra.mxu0 %v171
  %369 = vmatprep.subr.bf16.mxu0 %v180
  %370 = vmatpush1.bf16.msra.mxu0 %v179
  %371 = vmatprep.subr.bf16.mxu0 %v240
  %372 = vmatpush1.bf16.msra.mxu0 %v237
  %373 = vmatprep.subr.bf16.mxu0 0
  %374 = vmatpush1.bf16.msra.mxu0 0
  %375 = vmatprep.subr.bf16.mxu0 0
  %376 = vmatpush1.bf16.msra.mxu0 0
  %377 = vmatprep.subr.bf16.mxu0 0
  %378 = vmatpush1.bf16.msra.mxu0 0
  %379 = vmatprep.subr.bf16.mxu0 0
  %380 = vmatpush1.bf16.msra.mxu0 0
  %381 = vmatprep.subr.bf16.mxu0 0
  %382 = vmatpush1.bf16.msra.mxu0 0
  %383 = vmatprep.subr.bf16.mxu0 0
  %384 = vmatpush1.bf16.msra.mxu0 0
  %385 = vmatprep.subr.bf16.mxu0 0
  %386 = vmatpush1.bf16.msra.mxu0 0
  %387 = vmatprep.subr.bf16.mxu0 0
  %388 = vmatpush1.bf16.msra.mxu0 0
  %389 = vmatprep.subr.bf16.mxu0 0
  %390 = vmatpush1.bf16.msra.mxu0 0
  %391 = vmatprep.subr.bf16.mxu0 0
  %392 = vmatpush1.bf16.msra.mxu0 0
  %393 = vmatprep.subr.bf16.mxu0 0
  %394 = vmatpush1.bf16.msra.mxu0 0
  %395 = vmatprep.subr.bf16.mxu0 0
  %396 = vmatpush1.bf16.msra.mxu0 0
  %397 = vmatprep.mubr.bf16.mxu0 0
  %398 = vmatmul.mubr.bf16.gmra.mrb[0].mxu0 %v215
  %v399 = vpop.f32.mrb[0].mxu0
  %v400 = vadd.f32 0.0, %v399
  %v401 = vpop.f32.mrb[0].mxu0
  %v402 = vadd.f32 0.0, %v401
  %v403 = vpop.f32.mrb[0].mxu0
  %v404 = vpop.f32.mrb[0].mxu0
  %405 = vdwg.mxu0
  %vm406 = vcmask 1041408
  %v407 = vsel %vm406, %v277, 0.0
  %v408 = vrot.slane %v407, 4
  %v409 = vadd.f32 %v407, %v408
  %v410 = vrot.slane %v409, 2
  %v411 = vadd.f32 %v409, %v410
  %v412 = vrot.slane %v411, 1
  %v413 = vadd.f32 %v411, %v412
  %v414 = vsel %vm406, %v279, 0.0
  %v415 = vrot.slane %v414, 4
  %v416 = vadd.f32 %v414, %v415
  %v417 = vrot.slane %v416, 2
  %v418 = vadd.f32 %v416, %v417
  %v419 = vrot.slane %v418, 1
  %v420 = vadd.f32 %v418, %v419
  %v421 = vsel %vm406, %v318, 0.0
  %v422 = vrot.slane %v421, 4
  %v423 = vadd.f32 %v421, %v422
  %v424 = vrot.slane %v423, 2
  %v425 = vadd.f32 %v423, %v424
  %v426 = vrot.slane %v425, 1
  %v427 = vadd.f32 %v425, %v426
  %v428 = vsel %vm406, %v320, 0.0
  %v429 = vrot.slane %v428, 4
  %v430 = vadd.f32 %v428, %v429
  %v431 = vrot.slane %v430, 2
  %v432 = vadd.f32 %v430, %v431
  %v433 = vrot.slane %v432, 1
  %v434 = vadd.f32 %v432, %v433
  %v435 = vsel %vm406, %v359, 0.0
  %v436 = vrot.slane %v435, 4
  %v437 = vadd.f32 %v435, %v436
  %v438 = vrot.slane %v437, 2
  %v439 = vadd.f32 %v437, %v438
  %v440 = vrot.slane %v439, 1
  %v441 = vadd.f32 %v439, %v440
  %v442 = vsel %vm406, %v361, 0.0
  %v443 = vrot.slane %v442, 4
  %v444 = vadd.f32 %v442, %v443
  %v445 = vrot.slane %v444, 2
  %v446 = vadd.f32 %v444, %v445
  %v447 = vrot.slane %v446, 1
  %v448 = vadd.f32 %v446, %v447
  %v449 = vsel %vm406, %v400, 0.0
  %v450 = vrot.slane %v449, 4
  %v451 = vadd.f32 %v449, %v450
  %v452 = vrot.slane %v451, 2
  %v453 = vadd.f32 %v451, %v452
  %v454 = vrot.slane %v453, 1
  %v455 = vadd.f32 %v453, %v454
  %v456 = vsel %vm406, %v402, 0.0
  %v457 = vrot.slane %v456, 4
  %v458 = vadd.f32 %v456, %v457
  %v459 = vrot.slane %v458, 2
  %v460 = vadd.f32 %v458, %v459
  %v461 = vrot.slane %v460, 1
  %v462 = vadd.f32 %v460, %v461
  %v463 = vadd.f32 %v413, %v420
  %v464 = vadd.f32 %v463, %v427
  %v465 = vadd.f32 %v464, %v434
  %v466 = vadd.f32 %v465, %v441
  %v467 = vadd.f32 %v466, %v448
  %v468 = vadd.f32 %v467, %v455
  %v469 = vadd.f32 %v468, %v462
  %470 = vrot.lane.b32.xlu0 %v469, 64
  %v471 = vpop.permute.xlu0 %470
  %v472 = vadd.f32 %v469, %v471
  %v473 = vrcp.pop 32.0
  %v474 = vmul.f32 %v472, %v473
  %v475 = vlaneseq
  %v476 = vshrl.u32 %v475, 7
  %v477 = vsub.s32 0, %v476
  %v478 = vrot.slane %v474, %v477
  %v479 = vsub.f32 %v277, %v478
  %v480 = vsub.f32 %v279, %v478
  %v481 = vsub.f32 %v318, %v478
  %v482 = vsub.f32 %v320, %v478
  %v483 = vsub.f32 %v359, %v478
  %v484 = vsub.f32 %v361, %v478
  %v485 = vsub.f32 %v400, %v478
  %v486 = vsub.f32 %v402, %v478
  %v487 = vmul.f32 %v479, %v479
  %v488 = vmul.f32 %v480, %v480
  %v489 = vmul.f32 %v481, %v481
  %v490 = vmul.f32 %v482, %v482
  %v491 = vmul.f32 %v483, %v483
  %v492 = vmul.f32 %v484, %v484
  %v493 = vmul.f32 %v485, %v485
  %v494 = vmul.f32 %v486, %v486
  %v495 = vsel %vm406, %v487, 0.0
  %v496 = vrot.slane %v495, 4
  %v497 = vadd.f32 %v495, %v496
  %v498 = vrot.slane %v497, 2
  %v499 = vadd.f32 %v497, %v498
  %v500 = vrot.slane %v499, 1
  %v501 = vadd.f32 %v499, %v500
  %v502 = vsel %vm406, %v488, 0.0
  %v503 = vrot.slane %v502, 4
  %v504 = vadd.f32 %v502, %v503
  %v505 = vrot.slane %v504, 2
  %v506 = vadd.f32 %v504, %v505
  %v507 = vrot.slane %v506, 1
  %v508 = vadd.f32 %v506, %v507
  %v509 = vsel %vm406, %v489, 0.0
  %v510 = vrot.slane %v509, 4
  %v511 = vadd.f32 %v509, %v510
  %v512 = vrot.slane %v511, 2
  %v513 = vadd.f32 %v511, %v512
  %v514 = vrot.slane %v513, 1
  %v515 = vadd.f32 %v513, %v514
  %v516 = vsel %vm406, %v490, 0.0
  %v517 = vrot.slane %v516, 4
  %v518 = vadd.f32 %v516, %v517
  %v519 = vrot.slane %v518, 2
  %v520 = vadd.f32 %v518, %v519
  %v521 = vrot.slane %v520, 1
  %v522 = vadd.f32 %v520, %v521
  %v523 = vsel %vm406, %v491, 0.0
  %v524 = vrot.slane %v523, 4
  %v525 = vadd.f32 %v523, %v524
  %v526 = vrot.slane %v525, 2
  %v527 = vadd.f32 %v525, %v526
  %v528 = vrot.slane %v527, 1
  %v529 = vadd.f32 %v527, %v528
  %v530 = vsel %vm406, %v492, 0.0
  %v531 = vrot.slane %v530, 4
  %v532 = vadd.f32 %v530, %v531
  %v533 = vrot.slane %v532, 2
  %v534 = vadd.f32 %v532, %v533
  %v535 = vrot.slane %v534, 1
  %v536 = vadd.f32 %v534, %v535
  %v537 = vsel %vm406, %v493, 0.0
  %v538 = vrot.slane %v537, 4
  %v539 = vadd.f32 %v537, %v538
  %v540 = vrot.slane %v539, 2
  %v541 = vadd.f32 %v539, %v540
  %v542 = vrot.slane %v541, 1
  %v543 = vadd.f32 %v541, %v542
  %v544 = vsel %vm406, %v494, 0.0
  %v545 = vrot.slane %v544, 4
  %v546 = vadd.f32 %v544, %v545
  %v547 = vrot.slane %v546, 2
  %v548 = vadd.f32 %v546, %v547
  %v549 = vrot.slane %v548, 1
  %v550 = vadd.f32 %v548, %v549
  %v551 = vadd.f32 %v501, %v508
  %v552 = vadd.f32 %v551, %v515
  %v553 = vadd.f32 %v552, %v522
  %v554 = vadd.f32 %v553, %v529
  %v555 = vadd.f32 %v554, %v536
  %v556 = vadd.f32 %v555, %v543
  %v557 = vadd.f32 %v556, %v550
  %558 = vrot.lane.b32.xlu0 %v557, 64
  %v559 = vpop.permute.xlu0 %558
  %v560 = vadd.f32 %v557, %v559
  %v561 = vmul.f32 %v560, %v473
  %v562 = vld [vmem:[%s6] sm:$0x1]
  %v563 = vadd.f32 %v561, 1e-05
  %v564 = vrsqrt.pop %v563
  %v565 = vmul.f32 %v562, %v564
  %v566 = vlaneseq
  %v567 = vshrl.u32 %v566, 7
  %v568 = vsub.s32 0, %v567
  %v569 = vrot.slane %v565, %v568
  %v570 = vmul.f32 %v479, %v569
  %v571 = vmul.f32 %v480, %v569
  %v572 = vmul.f32 %v481, %v569
  %v573 = vmul.f32 %v482, %v569
  %v574 = vmul.f32 %v483, %v569
  %v575 = vmul.f32 %v484, %v569
  %v576 = vmul.f32 %v485, %v569
  %v577 = vmul.f32 %v486, %v569
  %v578 = vld [vmem:[%s6 + $0x1] sm:$0x1]
  %v579 = vlaneseq
  %v580 = vshrl.u32 %v579, 7
  %v581 = vsub.s32 0, %v580
  %v582 = vrot.slane %v578, %v581
  %v583 = vadd.f32 %v570, %v582
  %v584 = vadd.f32 %v571, %v582
  %v585 = vadd.f32 %v572, %v582
  %v586 = vadd.f32 %v573, %v582
  %v587 = vadd.f32 %v574, %v582
  %v588 = vadd.f32 %v575, %v582
  %v589 = vadd.f32 %v576, %v582
  %v590 = vadd.f32 %v577, %v582
  %vm591 = vcmp.ge.f32.partialorder %v583, 0.0
  %vm592 = vcmp.ge.f32.partialorder %v584, 0.0
  %vm593 = vcmp.ge.f32.partialorder %v585, 0.0
  %vm594 = vcmp.ge.f32.partialorder %v586, 0.0
  %vm595 = vcmp.ge.f32.partialorder %v587, 0.0
  %vm596 = vcmp.ge.f32.partialorder %v588, 0.0
  %vm597 = vcmp.ge.f32.partialorder %v589, 0.0
  %vm598 = vcmp.ge.f32.partialorder %v590, 0.0
  %v599 = vmul.f32 %v583, 0.01
  %v600 = vmul.f32 %v584, 0.01
  %v601 = vmul.f32 %v585, 0.01
  %v602 = vmul.f32 %v586, 0.01
  %v603 = vmul.f32 %v587, 0.01
  %v604 = vmul.f32 %v588, 0.01
  %v605 = vmul.f32 %v589, 0.01
  %v606 = vmul.f32 %v590, 0.01
  %v607 = vsel %vm591, %v583, %v599
  %v608 = vsel %vm592, %v584, %v600
  %v609 = vsel %vm593, %v585, %v601
  %v610 = vsel %vm594, %v586, %v602
  %v611 = vsel %vm595, %v587, %v603
  %v612 = vsel %vm596, %v588, %v604
  %v613 = vsel %vm597, %v589, %v605
  %v614 = vsel %vm598, %v590, %v606
  %v615 = vpack.c.bf16 %v607, %v607
  %v616 = vpack.c.bf16 %v608, %v608
  %v617 = vpack.c.bf16 %v609, %v609
  %v618 = vpack.c.bf16 %v610, %v610
  %v619 = vpack.c.bf16 %v611, %v611
  %v620 = vpack.c.bf16 %v612, %v612
  %v621 = vpack.c.bf16 %v613, %v613
  %v622 = vpack.c.bf16 %v614, %v614
  %v625 = vrot.slane %v616, 7
  %v626 = vrot.slane %v617, 7
  %v628 = vrot.slane %v617, 6
  %v629 = vrot.slane %v618, 6
  %v631 = vrot.slane %v618, 5
  %v632 = vrot.slane %v619, 5
  %v634 = vrot.slane %v619, 4
  %v635 = vrot.slane %v620, 4
  %v637 = vrot.slane %v620, 3
  %v638 = vrot.slane %v621, 3
  %v640 = vrot.slane %v621, 2
  %v641 = vrot.slane %v622, 2
  %vm642 = vcmask 1040384
  %v645 = vsel %vm642, %v615, %v625
  %v648 = vsel %vm642, %v616, %v626
  %v650 = vsel %vm406, %v645, %v628
  %v652 = vsel %vm406, %v648, %v629
  %vm653 = vcmask 1042432
  %v655 = vsel %vm653, %v650, %v631
  %v657 = vsel %vm653, %v652, %v632
  %vm658 = vcmask 1043456
  %v660 = vsel %vm658, %v655, %v634
  %v662 = vsel %vm658, %v657, %v635
  %vm663 = vcmask 1044480
  %v665 = vsel %vm663, %v660, %v637
  %v667 = vsel %vm663, %v662, %v638
  %v669 = vsel %vm217, %v665, %v640
  %v672 = vsel %vm217, %v667, %v641
  %v673 = vld [vmem:[%s2] sm:$0xf]
  %v674 = vld [vmem:[%s2 + $0x4] sm:$0xf]
  %v675 = vld [vmem:[%s2 + $0x8] sm:$0xf]
  %v676 = vld [vmem:[%s2 + $0xc] sm:$0xf]
  %v677 = vld [vmem:[%s2 + $0x10] sm:$0xf]
  %v678 = vld [vmem:[%s2 + $0x14] sm:$0xf]
  %v679 = vld [vmem:[%s2 + $0x18] sm:$0xf]
  %v680 = vld [vmem:[%s2 + $0x1c] sm:$0xf]
  %v681 = vld [vmem:[%s2 + $0x20] sm:$0xf]
  %v682 = vld [vmem:[%s2 + $0x24] sm:$0xf]
  %v683 = vld [vmem:[%s2 + $0x28] sm:$0xf]
  %v684 = vld [vmem:[%s2 + $0x2c] sm:$0xf]
  %v685 = vld [vmem:[%s2 + $0x30] sm:$0xf]
  %v686 = vld [vmem:[%s2 + $0x34] sm:$0xf]
  %v687 = vld [vmem:[%s2 + $0x38] sm:$0xf]
  %v688 = vld [vmem:[%s2 + $0x3c] sm:$0xf]
  %v689 = vld [vmem:[%s2 + $0x40] sm:$0xf]
  %v690 = vld [vmem:[%s2 + $0x44] sm:$0xf]
  %v691 = vld [vmem:[%s2 + $0x48] sm:$0xf]
  %v692 = vld [vmem:[%s2 + $0x4c] sm:$0xf]
  %v693 = vld [vmem:[%s2 + $0x50] sm:$0xf]
  %v694 = vld [vmem:[%s2 + $0x54] sm:$0xf]
  %v695 = vld [vmem:[%s2 + $0x58] sm:$0xf]
  %v696 = vld [vmem:[%s2 + $0x5c] sm:$0xf]
  %v721 = vunpack.c.l.b16 %v673
  %v722 = vunpack.c.l.b16 %v674
  %v723 = vunpack.c.l.b16 %v675
  %v724 = vunpack.c.l.b16 %v676
  %v725 = vunpack.c.l.b16 %v677
  %v726 = vunpack.c.l.b16 %v678
  %v727 = vunpack.c.l.b16 %v679
  %v728 = vunpack.c.l.b16 %v680
  %v729 = vunpack.c.l.b16 %v681
  %v730 = vunpack.c.l.b16 %v682
  %v731 = vunpack.c.l.b16 %v683
  %v732 = vunpack.c.l.b16 %v684
  %v733 = vunpack.c.l.b16 %v685
  %v734 = vunpack.c.l.b16 %v686
  %v735 = vunpack.c.l.b16 %v687
  %v736 = vunpack.c.l.b16 %v688
  %v737 = vunpack.c.l.b16 %v689
  %v738 = vunpack.c.l.b16 %v690
  %v739 = vunpack.c.l.b16 %v691
  %v740 = vunpack.c.l.b16 %v692
  %v741 = vunpack.c.l.b16 %v693
  %v742 = vunpack.c.l.b16 %v694
  %v743 = vunpack.c.l.b16 %v695
  %v744 = vunpack.c.l.b16 %v696
  %v745 = vpack.c.b16 %v722, %v721
  %v746 = vpack.c.b16 %v724, %v723
  %v747 = vpack.c.b16 %v726, %v725
  %v748 = vpack.c.b16 %v728, %v727
  %v749 = vpack.c.b16 %v730, %v729
  %v750 = vpack.c.b16 %v732, %v731
  %v751 = vpack.c.b16 %v734, %v733
  %v752 = vpack.c.b16 %v736, %v735
  %v753 = vpack.c.b16 %v738, %v737
  %v754 = vpack.c.b16 %v740, %v739
  %v755 = vpack.c.b16 %v742, %v741
  %v756 = vpack.c.b16 %v744, %v743
  %vm769 = vcmask 523264
  %v770 = vsel %vm769, %v672, 0
  %772 = vmatprep.subr.bf16.mxu0 0
  %773 = vmatpush1.bf16.msra.mxu0 %v745
  %774 = vmatprep.subr.bf16.mxu0 0
  %775 = vmatpush1.bf16.msra.mxu0 %v746
  %776 = vmatprep.subr.bf16.mxu0 0
  %777 = vmatpush1.bf16.msra.mxu0 %v747
  %778 = vmatprep.subr.bf16.mxu0 0
  %779 = vmatpush1.bf16.msra.mxu0 %v748
  %780 = vmatprep.subr.bf16.mxu0 0
  %781 = vmatpush1.bf16.msra.mxu0 %v749
  %782 = vmatprep.subr.bf16.mxu0 0
  %783 = vmatpush1.bf16.msra.mxu0 %v750
  %784 = vmatprep.subr.bf16.mxu0 0
  %785 = vmatpush1.bf16.msra.mxu0 %v751
  %786 = vmatprep.subr.bf16.mxu0 0
  %787 = vmatpush1.bf16.msra.mxu0 %v752
  %788 = vmatprep.subr.bf16.mxu0 0
  %789 = vmatpush1.bf16.msra.mxu0 %v753
  %790 = vmatprep.subr.bf16.mxu0 0
  %791 = vmatpush1.bf16.msra.mxu0 %v754
  %792 = vmatprep.subr.bf16.mxu0 0
  %793 = vmatpush1.bf16.msra.mxu0 %v755
  %794 = vmatprep.subr.bf16.mxu0 0
  %795 = vmatpush1.bf16.msra.mxu0 %v756
  %796 = vmatprep.subr.bf16.mxu0 0
  %797 = vmatpush1.bf16.msra.mxu0 0
  %798 = vmatprep.subr.bf16.mxu0 0
  %799 = vmatpush1.bf16.msra.mxu0 0
  %800 = vmatprep.subr.bf16.mxu0 0
  %801 = vmatpush1.bf16.msra.mxu0 0
  %802 = vmatprep.subr.bf16.mxu0 0
  %803 = vmatpush1.bf16.msra.mxu0 0
  %804 = vmatprep.mubr.bf16.mxu0 %v770
  %805 = vmatmul.mubr.bf16.gmra.mrb[0].mxu0 %v669
  %v806 = vpop.f32.mrb[0].mxu0
  %v807 = vadd.f32 0.0, %v806
  %v808 = vpop.f32.mrb[0].mxu0
  %v809 = vpop.f32.mrb[0].mxu0
  %v810 = vadd.f32 0.0, %v809
  %v811 = vpop.f32.mrb[0].mxu0
  %812 = vdwg.mxu0
  %v813 = vsel %vm769, %v807, 0.0
  %vm814 = vcmask 521216
  %v815 = vsel %vm814, %v810, 0.0
  %v816 = vadd.f32 %v813, %v815
  %v817 = vrot.slane %v816, 4
  %v818 = vadd.f32 %v816, %v817
  %v819 = vrot.slane %v818, 2
  %v820 = vadd.f32 %v818, %v819
  %v821 = vrot.slane %v820, 1
  %v822 = vadd.f32 %v820, %v821
  %v823 = vrcp.pop 14.0
  %v824 = vmul.f32 %v822, %v823
  %v825 = vsub.f32 %v807, %v824
  %v826 = vsub.f32 %v810, %v824
  %v827 = vmul.f32 %v825, %v825
  %v828 = vmul.f32 %v826, %v826
  %v829 = vsel %vm769, %v827, 0.0
  %v830 = vsel %vm814, %v828, 0.0
  %v831 = vadd.f32 %v829, %v830
  %v832 = vrot.slane %v831, 4
  %v833 = vadd.f32 %v831, %v832
  %v834 = vrot.slane %v833, 2
  %v835 = vadd.f32 %v833, %v834
  %v836 = vrot.slane %v835, 1
  %v837 = vadd.f32 %v835, %v836
  %v838 = vmul.f32 %v837, %v823
  %v839 = vld [vmem:[%s6 + $0x2] sm:$0x1]
  %v840 = vadd.f32 %v838, 1e-05
  %v841 = vrsqrt.pop %v840
  %v842 = vmul.f32 %v839, %v841
  %v843 = vlaneseq
  %v844 = vshrl.u32 %v843, 7
  %v845 = vsub.s32 0, %v844
  %v846 = vrot.slane %v842, %v845
  %v847 = vmul.f32 %v825, %v846
  %v848 = vmul.f32 %v826, %v846
  %v849 = vld [vmem:[%s6 + $0x3] sm:$0x1]
  %v850 = vlaneseq
  %v851 = vshrl.u32 %v850, 7
  %v852 = vsub.s32 0, %v851
  %v853 = vrot.slane %v849, %v852
  %v854 = vadd.f32 %v847, %v853
  %v855 = vadd.f32 %v848, %v853
  %vm856 = vcmp.ge.f32.partialorder %v854, 0.0
  %vm857 = vcmp.ge.f32.partialorder %v855, 0.0
  %v858 = vmul.f32 %v854, 0.01
  %v859 = vmul.f32 %v855, 0.01
  %v860 = vsel %vm856, %v854, %v858
  %v861 = vsel %vm857, %v855, %v859
  %v862 = vpack.c.bf16 %v861, %v860
  %v863 = vld [vmem:[%s3] sm:$0xf]
  %v864 = vld [vmem:[%s3 + $0x4] sm:$0xf]
  %v865 = vld [vmem:[%s3 + $0x8] sm:$0xf]
  %v866 = vld [vmem:[%s3 + $0xc] sm:$0xf]
  %v867 = vld [vmem:[%s3 + $0x10] sm:$0xf]
  %v868 = vld [vmem:[%s3 + $0x14] sm:$0xf]
  %v869 = vld [vmem:[%s3 + $0x18] sm:$0xf]
  %v870 = vld [vmem:[%s3 + $0x1c] sm:$0xf]
  %v871 = vld [vmem:[%s3 + $0x20] sm:$0xf]
  %v872 = vld [vmem:[%s3 + $0x24] sm:$0xf]
  %v873 = vld [vmem:[%s3 + $0x28] sm:$0xf]
  %v874 = vld [vmem:[%s3 + $0x2c] sm:$0xf]
  %v875 = vld [vmem:[%s3 + $0x30] sm:$0xf]
  %v876 = vld [vmem:[%s3 + $0x34] sm:$0xf]
  %v877 = vld [vmem:[%s3 + $0x38] sm:$0xf]
  %v878 = vld [vmem:[%s3 + $0x3c] sm:$0xf]
  %v880 = vrot.slane %v862, 1
  %v889 = vunpack.c.l.b16 %v871
  %v890 = vunpack.c.l.b16 %v872
  %v891 = vunpack.c.l.b16 %v873
  %v892 = vunpack.c.l.b16 %v874
  %v893 = vunpack.c.l.b16 %v875
  %v894 = vunpack.c.l.b16 %v876
  %v895 = vunpack.c.l.b16 %v877
  %v896 = vunpack.c.l.b16 %v878
  %v897 = vpack.c.b16 %v890, %v889
  %v898 = vpack.c.b16 %v892, %v891
  %v899 = vpack.c.b16 %v894, %v893
  %v900 = vpack.c.b16 %v896, %v895
  %v906 = vsel %vm769, %v880, 0
  %908 = vmatprep.subr.bf16.mxu0 0
  %909 = vmatpush1.bf16.msra.mxu0 %v897
  %910 = vmatprep.subr.bf16.mxu0 0
  %911 = vmatpush1.bf16.msra.mxu0 %v898
  %912 = vmatprep.subr.bf16.mxu0 0
  %913 = vmatpush1.bf16.msra.mxu0 %v899
  %914 = vmatprep.subr.bf16.mxu0 0
  %915 = vmatpush1.bf16.msra.mxu0 %v900
  %916 = vmatprep.subr.bf16.mxu0 0
  %917 = vmatpush1.bf16.msra.mxu0 0
  %918 = vmatprep.subr.bf16.mxu0 0
  %919 = vmatpush1.bf16.msra.mxu0 0
  %920 = vmatprep.subr.bf16.mxu0 0
  %921 = vmatpush1.bf16.msra.mxu0 0
  %922 = vmatprep.subr.bf16.mxu0 0
  %923 = vmatpush1.bf16.msra.mxu0 0
  %924 = vmatprep.subr.bf16.mxu0 0
  %925 = vmatpush1.bf16.msra.mxu0 0
  %926 = vmatprep.subr.bf16.mxu0 0
  %927 = vmatpush1.bf16.msra.mxu0 0
  %928 = vmatprep.subr.bf16.mxu0 0
  %929 = vmatpush1.bf16.msra.mxu0 0
  %930 = vmatprep.subr.bf16.mxu0 0
  %931 = vmatpush1.bf16.msra.mxu0 0
  %932 = vmatprep.subr.bf16.mxu0 0
  %933 = vmatpush1.bf16.msra.mxu0 0
  %934 = vmatprep.subr.bf16.mxu0 0
  %935 = vmatpush1.bf16.msra.mxu0 0
  %936 = vmatprep.subr.bf16.mxu0 0
  %937 = vmatpush1.bf16.msra.mxu0 0
  %938 = vmatprep.subr.bf16.mxu0 0
  %939 = vmatpush1.bf16.msra.mxu0 0
  %940 = vmatprep.mubr.bf16.mxu0 0
  %941 = vmatmul.mubr.bf16.gmra.mrb[0].mxu0 %v906
  %v942 = vpop.f32.mrb[0].mxu0
  %v943 = vadd.f32 0.0, %v942
  %v944 = vpop.f32.mrb[0].mxu0
  %v945 = vpop.f32.mrb[0].mxu0
  %v946 = vpop.f32.mrb[0].mxu0
  %947 = vdwg.mxu0
  %v956 = vunpack.c.l.b16 %v863
  %v957 = vunpack.c.l.b16 %v864
  %v958 = vunpack.c.l.b16 %v865
  %v959 = vunpack.c.l.b16 %v866
  %v960 = vunpack.c.l.b16 %v867
  %v961 = vunpack.c.l.b16 %v868
  %v962 = vunpack.c.l.b16 %v869
  %v963 = vunpack.c.l.b16 %v870
  %v964 = vpack.c.b16 %v957, %v956
  %v965 = vpack.c.b16 %v959, %v958
  %v966 = vpack.c.b16 %v961, %v960
  %v967 = vpack.c.b16 %v963, %v962
  %v973 = vsel %vm769, %v862, 0
  %975 = vmatprep.subr.bf16.mxu0 0
  %976 = vmatpush1.bf16.msra.mxu0 %v964
  %977 = vmatprep.subr.bf16.mxu0 0
  %978 = vmatpush1.bf16.msra.mxu0 %v965
  %979 = vmatprep.subr.bf16.mxu0 0
  %980 = vmatpush1.bf16.msra.mxu0 %v966
  %981 = vmatprep.subr.bf16.mxu0 0
  %982 = vmatpush1.bf16.msra.mxu0 %v967
  %983 = vmatprep.subr.bf16.mxu0 0
  %984 = vmatpush1.bf16.msra.mxu0 0
  %985 = vmatprep.subr.bf16.mxu0 0
  %986 = vmatpush1.bf16.msra.mxu0 0
  %987 = vmatprep.subr.bf16.mxu0 0
  %988 = vmatpush1.bf16.msra.mxu0 0
  %989 = vmatprep.subr.bf16.mxu0 0
  %990 = vmatpush1.bf16.msra.mxu0 0
  %991 = vmatprep.subr.bf16.mxu0 0
  %992 = vmatpush1.bf16.msra.mxu0 0
  %993 = vmatprep.subr.bf16.mxu0 0
  %994 = vmatpush1.bf16.msra.mxu0 0
  %995 = vmatprep.subr.bf16.mxu0 0
  %996 = vmatpush1.bf16.msra.mxu0 0
  %997 = vmatprep.subr.bf16.mxu0 0
  %998 = vmatpush1.bf16.msra.mxu0 0
  %999 = vmatprep.subr.bf16.mxu0 0
  %1000 = vmatpush1.bf16.msra.mxu0 0
  %1001 = vmatprep.subr.bf16.mxu0 0
  %1002 = vmatpush1.bf16.msra.mxu0 0
  %1003 = vmatprep.subr.bf16.mxu0 0
  %1004 = vmatpush1.bf16.msra.mxu0 0
  %1005 = vmatprep.subr.bf16.mxu0 0
  %1006 = vmatpush1.bf16.msra.mxu0 0
  %1007 = vmatprep.mubr.bf16.mxu0 0
  %1008 = vmatmul.mubr.bf16.gmra.mrb[0].mxu0 %v973
  %v1009 = vpop.f32.mrb[0].mxu0
  %v1010 = vadd.f32 %v943, %v1009
  %v1011 = vpop.f32.mrb[0].mxu0
  %v1012 = vpop.f32.mrb[0].mxu0
  %v1013 = vpop.f32.mrb[0].mxu0
  %1014 = vdwg.mxu0
  %v1015 = vld [vmem:[%s3 + $0x40] sm:$0xf]
  %v1016 = vld [vmem:[%s3 + $0x44] sm:$0xf]
  %v1017 = vld [vmem:[%s3 + $0x48] sm:$0xf]
  %v1018 = vld [vmem:[%s3 + $0x4c] sm:$0xf]
  %v1019 = vld [vmem:[%s3 + $0x50] sm:$0xf]
  %v1020 = vld [vmem:[%s3 + $0x54] sm:$0xf]
  %v1021 = vld [vmem:[%s3 + $0x58] sm:$0xf]
  %v1022 = vld [vmem:[%s3 + $0x5c] sm:$0xf]
  %v1023 = vrot.slane %v862, 2
  %v1032 = vunpack.c.l.b16 %v1015
  %v1033 = vunpack.c.l.b16 %v1016
  %v1034 = vunpack.c.l.b16 %v1017
  %v1035 = vunpack.c.l.b16 %v1018
  %v1036 = vunpack.c.l.b16 %v1019
  %v1037 = vunpack.c.l.b16 %v1020
  %v1038 = vunpack.c.l.b16 %v1021
  %v1039 = vunpack.c.l.b16 %v1022
  %v1040 = vpack.c.b16 %v1033, %v1032
  %v1041 = vpack.c.b16 %v1035, %v1034
  %v1042 = vpack.c.b16 %v1037, %v1036
  %v1043 = vpack.c.b16 %v1039, %v1038
  %v1049 = vsel %vm769, %v1023, 0
  %1051 = vmatprep.subr.bf16.mxu0 0
  %1052 = vmatpush1.bf16.msra.mxu0 %v1040
  %1053 = vmatprep.subr.bf16.mxu0 0
  %1054 = vmatpush1.bf16.msra.mxu0 %v1041
  %1055 = vmatprep.subr.bf16.mxu0 0
  %1056 = vmatpush1.bf16.msra.mxu0 %v1042
  %1057 = vmatprep.subr.bf16.mxu0 0
  %1058 = vmatpush1.bf16.msra.mxu0 %v1043
  %1059 = vmatprep.subr.bf16.mxu0 0
  %1060 = vmatpush1.bf16.msra.mxu0 0
  %1061 = vmatprep.subr.bf16.mxu0 0
  %1062 = vmatpush1.bf16.msra.mxu0 0
  %1063 = vmatprep.subr.bf16.mxu0 0
  %1064 = vmatpush1.bf16.msra.mxu0 0
  %1065 = vmatprep.subr.bf16.mxu0 0
  %1066 = vmatpush1.bf16.msra.mxu0 0
  %1067 = vmatprep.subr.bf16.mxu0 0
  %1068 = vmatpush1.bf16.msra.mxu0 0
  %1069 = vmatprep.subr.bf16.mxu0 0
  %1070 = vmatpush1.bf16.msra.mxu0 0
  %1071 = vmatprep.subr.bf16.mxu0 0
  %1072 = vmatpush1.bf16.msra.mxu0 0
  %1073 = vmatprep.subr.bf16.mxu0 0
  %1074 = vmatpush1.bf16.msra.mxu0 0
  %1075 = vmatprep.subr.bf16.mxu0 0
  %1076 = vmatpush1.bf16.msra.mxu0 0
  %1077 = vmatprep.subr.bf16.mxu0 0
  %1078 = vmatpush1.bf16.msra.mxu0 0
  %1079 = vmatprep.subr.bf16.mxu0 0
  %1080 = vmatpush1.bf16.msra.mxu0 0
  %1081 = vmatprep.subr.bf16.mxu0 0
  %1082 = vmatpush1.bf16.msra.mxu0 0
  %1083 = vmatprep.mubr.bf16.mxu0 0
  %1084 = vmatmul.mubr.bf16.gmra.mrb[0].mxu0 %v1049
  %v1085 = vpop.f32.mrb[0].mxu0
  %v1086 = vadd.f32 0.0, %v1085
  %v1087 = vpop.f32.mrb[0].mxu0
  %v1088 = vpop.f32.mrb[0].mxu0
  %v1089 = vpop.f32.mrb[0].mxu0
  %1090 = vdwg.mxu0
  %v1091 = vadd.f32 %v1010, %v1086
  %v1092 = vld [vmem:[%s3 + $0x60] sm:$0xf]
  %v1093 = vld [vmem:[%s3 + $0x64] sm:$0xf]
  %v1094 = vld [vmem:[%s3 + $0x68] sm:$0xf]
  %v1095 = vld [vmem:[%s3 + $0x6c] sm:$0xf]
  %v1096 = vld [vmem:[%s3 + $0x70] sm:$0xf]
  %v1097 = vld [vmem:[%s3 + $0x74] sm:$0xf]
  %v1098 = vld [vmem:[%s3 + $0x78] sm:$0xf]
  %v1099 = vld [vmem:[%s3 + $0x7c] sm:$0xf]
  %v1100 = vrot.slane %v862, 3
  %v1109 = vunpack.c.l.b16 %v1092
  %v1110 = vunpack.c.l.b16 %v1093
  %v1111 = vunpack.c.l.b16 %v1094
  %v1112 = vunpack.c.l.b16 %v1095
  %v1113 = vunpack.c.l.b16 %v1096
  %v1114 = vunpack.c.l.b16 %v1097
  %v1115 = vunpack.c.l.b16 %v1098
  %v1116 = vunpack.c.l.b16 %v1099
  %v1117 = vpack.c.b16 %v1110, %v1109
  %v1118 = vpack.c.b16 %v1112, %v1111
  %v1119 = vpack.c.b16 %v1114, %v1113
  %v1120 = vpack.c.b16 %v1116, %v1115
  %v1126 = vsel %vm769, %v1100, 0
  %1128 = vmatprep.subr.bf16.mxu0 0
  %1129 = vmatpush1.bf16.msra.mxu0 %v1117
  %1130 = vmatprep.subr.bf16.mxu0 0
  %1131 = vmatpush1.bf16.msra.mxu0 %v1118
  %1132 = vmatprep.subr.bf16.mxu0 0
  %1133 = vmatpush1.bf16.msra.mxu0 %v1119
  %1134 = vmatprep.subr.bf16.mxu0 0
  %1135 = vmatpush1.bf16.msra.mxu0 %v1120
  %1136 = vmatprep.subr.bf16.mxu0 0
  %1137 = vmatpush1.bf16.msra.mxu0 0
  %1138 = vmatprep.subr.bf16.mxu0 0
  %1139 = vmatpush1.bf16.msra.mxu0 0
  %1140 = vmatprep.subr.bf16.mxu0 0
  %1141 = vmatpush1.bf16.msra.mxu0 0
  %1142 = vmatprep.subr.bf16.mxu0 0
  %1143 = vmatpush1.bf16.msra.mxu0 0
  %1144 = vmatprep.subr.bf16.mxu0 0
  %1145 = vmatpush1.bf16.msra.mxu0 0
  %1146 = vmatprep.subr.bf16.mxu0 0
  %1147 = vmatpush1.bf16.msra.mxu0 0
  %1148 = vmatprep.subr.bf16.mxu0 0
  %1149 = vmatpush1.bf16.msra.mxu0 0
  %1150 = vmatprep.subr.bf16.mxu0 0
  %1151 = vmatpush1.bf16.msra.mxu0 0
  %1152 = vmatprep.subr.bf16.mxu0 0
  %1153 = vmatpush1.bf16.msra.mxu0 0
  %1154 = vmatprep.subr.bf16.mxu0 0
  %1155 = vmatpush1.bf16.msra.mxu0 0
  %1156 = vmatprep.subr.bf16.mxu0 0
  %1157 = vmatpush1.bf16.msra.mxu0 0
  %1158 = vmatprep.subr.bf16.mxu0 0
  %1159 = vmatpush1.bf16.msra.mxu0 0
  %1160 = vmatprep.mubr.bf16.mxu0 0
  %1161 = vmatmul.mubr.bf16.gmra.mrb[0].mxu0 %v1126
  %v1162 = vpop.f32.mrb[0].mxu0
  %v1163 = vadd.f32 0.0, %v1162
  %v1164 = vpop.f32.mrb[0].mxu0
  %v1165 = vpop.f32.mrb[0].mxu0
  %v1166 = vpop.f32.mrb[0].mxu0
  %1167 = vdwg.mxu0
  %v1168 = vadd.f32 %v1091, %v1163
  %v1169 = vld [vmem:[%s3 + $0x80] sm:$0xf]
  %v1170 = vld [vmem:[%s3 + $0x84] sm:$0xf]
  %v1171 = vld [vmem:[%s3 + $0x88] sm:$0xf]
  %v1172 = vld [vmem:[%s3 + $0x8c] sm:$0xf]
  %v1173 = vld [vmem:[%s3 + $0x90] sm:$0xf]
  %v1174 = vld [vmem:[%s3 + $0x94] sm:$0xf]
  %v1175 = vld [vmem:[%s3 + $0x98] sm:$0xf]
  %v1176 = vld [vmem:[%s3 + $0x9c] sm:$0xf]
  %v1177 = vrot.slane %v862, 4
  %v1186 = vunpack.c.l.b16 %v1169
  %v1187 = vunpack.c.l.b16 %v1170
  %v1188 = vunpack.c.l.b16 %v1171
  %v1189 = vunpack.c.l.b16 %v1172
  %v1190 = vunpack.c.l.b16 %v1173
  %v1191 = vunpack.c.l.b16 %v1174
  %v1192 = vunpack.c.l.b16 %v1175
  %v1193 = vunpack.c.l.b16 %v1176
  %v1194 = vpack.c.b16 %v1187, %v1186
  %v1195 = vpack.c.b16 %v1189, %v1188
  %v1196 = vpack.c.b16 %v1191, %v1190
  %v1197 = vpack.c.b16 %v1193, %v1192
  %v1203 = vsel %vm769, %v1177, 0
  %1205 = vmatprep.subr.bf16.mxu0 0
  %1206 = vmatpush1.bf16.msra.mxu0 %v1194
  %1207 = vmatprep.subr.bf16.mxu0 0
  %1208 = vmatpush1.bf16.msra.mxu0 %v1195
  %1209 = vmatprep.subr.bf16.mxu0 0
  %1210 = vmatpush1.bf16.msra.mxu0 %v1196
  %1211 = vmatprep.subr.bf16.mxu0 0
  %1212 = vmatpush1.bf16.msra.mxu0 %v1197
  %1213 = vmatprep.subr.bf16.mxu0 0
  %1214 = vmatpush1.bf16.msra.mxu0 0
  %1215 = vmatprep.subr.bf16.mxu0 0
  %1216 = vmatpush1.bf16.msra.mxu0 0
  %1217 = vmatprep.subr.bf16.mxu0 0
  %1218 = vmatpush1.bf16.msra.mxu0 0
  %1219 = vmatprep.subr.bf16.mxu0 0
  %1220 = vmatpush1.bf16.msra.mxu0 0
  %1221 = vmatprep.subr.bf16.mxu0 0
  %1222 = vmatpush1.bf16.msra.mxu0 0
  %1223 = vmatprep.subr.bf16.mxu0 0
  %1224 = vmatpush1.bf16.msra.mxu0 0
  %1225 = vmatprep.subr.bf16.mxu0 0
  %1226 = vmatpush1.bf16.msra.mxu0 0
  %1227 = vmatprep.subr.bf16.mxu0 0
  %1228 = vmatpush1.bf16.msra.mxu0 0
  %1229 = vmatprep.subr.bf16.mxu0 0
  %1230 = vmatpush1.bf16.msra.mxu0 0
  %1231 = vmatprep.subr.bf16.mxu0 0
  %1232 = vmatpush1.bf16.msra.mxu0 0
  %1233 = vmatprep.subr.bf16.mxu0 0
  %1234 = vmatpush1.bf16.msra.mxu0 0
  %1235 = vmatprep.subr.bf16.mxu0 0
  %1236 = vmatpush1.bf16.msra.mxu0 0
  %1237 = vmatprep.mubr.bf16.mxu0 0
  %1238 = vmatmul.mubr.bf16.gmra.mrb[0].mxu0 %v1203
  %v1239 = vpop.f32.mrb[0].mxu0
  %v1240 = vadd.f32 0.0, %v1239
  %v1241 = vpop.f32.mrb[0].mxu0
  %v1242 = vpop.f32.mrb[0].mxu0
  %v1243 = vpop.f32.mrb[0].mxu0
  %1244 = vdwg.mxu0
  %v1245 = vadd.f32 %v1168, %v1240
  %v1246 = vld [vmem:[%s3 + $0xa0] sm:$0xf]
  %v1247 = vld [vmem:[%s3 + $0xa4] sm:$0xf]
  %v1248 = vld [vmem:[%s3 + $0xa8] sm:$0xf]
  %v1249 = vld [vmem:[%s3 + $0xac] sm:$0xf]
  %v1250 = vld [vmem:[%s3 + $0xb0] sm:$0xf]
  %v1251 = vld [vmem:[%s3 + $0xb4] sm:$0xf]
  %v1252 = vld [vmem:[%s3 + $0xb8] sm:$0xf]
  %v1253 = vld [vmem:[%s3 + $0xbc] sm:$0xf]
  %v1254 = vrot.slane %v862, 5
  %v1263 = vunpack.c.l.b16 %v1246
  %v1264 = vunpack.c.l.b16 %v1247
  %v1265 = vunpack.c.l.b16 %v1248
  %v1266 = vunpack.c.l.b16 %v1249
  %v1267 = vunpack.c.l.b16 %v1250
  %v1268 = vunpack.c.l.b16 %v1251
  %v1269 = vunpack.c.l.b16 %v1252
  %v1270 = vunpack.c.l.b16 %v1253
  %v1271 = vpack.c.b16 %v1264, %v1263
  %v1272 = vpack.c.b16 %v1266, %v1265
  %v1273 = vpack.c.b16 %v1268, %v1267
  %v1274 = vpack.c.b16 %v1270, %v1269
  %v1280 = vsel %vm769, %v1254, 0
  %1282 = vmatprep.subr.bf16.mxu0 0
  %1283 = vmatpush1.bf16.msra.mxu0 %v1271
  %1284 = vmatprep.subr.bf16.mxu0 0
  %1285 = vmatpush1.bf16.msra.mxu0 %v1272
  %1286 = vmatprep.subr.bf16.mxu0 0
  %1287 = vmatpush1.bf16.msra.mxu0 %v1273
  %1288 = vmatprep.subr.bf16.mxu0 0
  %1289 = vmatpush1.bf16.msra.mxu0 %v1274
  %1290 = vmatprep.subr.bf16.mxu0 0
  %1291 = vmatpush1.bf16.msra.mxu0 0
  %1292 = vmatprep.subr.bf16.mxu0 0
  %1293 = vmatpush1.bf16.msra.mxu0 0
  %1294 = vmatprep.subr.bf16.mxu0 0
  %1295 = vmatpush1.bf16.msra.mxu0 0
  %1296 = vmatprep.subr.bf16.mxu0 0
  %1297 = vmatpush1.bf16.msra.mxu0 0
  %1298 = vmatprep.subr.bf16.mxu0 0
  %1299 = vmatpush1.bf16.msra.mxu0 0
  %1300 = vmatprep.subr.bf16.mxu0 0
  %1301 = vmatpush1.bf16.msra.mxu0 0
  %1302 = vmatprep.subr.bf16.mxu0 0
  %1303 = vmatpush1.bf16.msra.mxu0 0
  %1304 = vmatprep.subr.bf16.mxu0 0
  %1305 = vmatpush1.bf16.msra.mxu0 0
  %1306 = vmatprep.subr.bf16.mxu0 0
  %1307 = vmatpush1.bf16.msra.mxu0 0
  %1308 = vmatprep.subr.bf16.mxu0 0
  %1309 = vmatpush1.bf16.msra.mxu0 0
  %1310 = vmatprep.subr.bf16.mxu0 0
  %1311 = vmatpush1.bf16.msra.mxu0 0
  %1312 = vmatprep.subr.bf16.mxu0 0
  %1313 = vmatpush1.bf16.msra.mxu0 0
  %1314 = vmatprep.mubr.bf16.mxu0 0
  %1315 = vmatmul.mubr.bf16.gmra.mrb[0].mxu0 %v1280
  %v1316 = vpop.f32.mrb[0].mxu0
  %v1317 = vadd.f32 0.0, %v1316
  %v1318 = vpop.f32.mrb[0].mxu0
  %v1319 = vpop.f32.mrb[0].mxu0
  %v1320 = vpop.f32.mrb[0].mxu0
  %1321 = vdwg.mxu0
  %v1322 = vadd.f32 %v1245, %v1317
  %v1323 = vld [vmem:[%s3 + $0xc0] sm:$0xf]
  %v1324 = vld [vmem:[%s3 + $0xc4] sm:$0xf]
  %v1325 = vld [vmem:[%s3 + $0xc8] sm:$0xf]
  %v1326 = vld [vmem:[%s3 + $0xcc] sm:$0xf]
  %v1327 = vld [vmem:[%s3 + $0xd0] sm:$0xf]
  %v1328 = vld [vmem:[%s3 + $0xd4] sm:$0xf]
  %v1329 = vld [vmem:[%s3 + $0xd8] sm:$0xf]
  %v1330 = vld [vmem:[%s3 + $0xdc] sm:$0xf]
  %v1331 = vrot.slane %v862, 6
  %v1340 = vunpack.c.l.b16 %v1323
  %v1341 = vunpack.c.l.b16 %v1324
  %v1342 = vunpack.c.l.b16 %v1325
  %v1343 = vunpack.c.l.b16 %v1326
  %v1344 = vunpack.c.l.b16 %v1327
  %v1345 = vunpack.c.l.b16 %v1328
  %v1346 = vunpack.c.l.b16 %v1329
  %v1347 = vunpack.c.l.b16 %v1330
  %v1348 = vpack.c.b16 %v1341, %v1340
  %v1349 = vpack.c.b16 %v1343, %v1342
  %v1350 = vpack.c.b16 %v1345, %v1344
  %v1351 = vpack.c.b16 %v1347, %v1346
  %v1357 = vsel %vm769, %v1331, 0
  %1359 = vmatprep.subr.bf16.mxu0 0
  %1360 = vmatpush1.bf16.msra.mxu0 %v1348
  %1361 = vmatprep.subr.bf16.mxu0 0
  %1362 = vmatpush1.bf16.msra.mxu0 %v1349
  %1363 = vmatprep.subr.bf16.mxu0 0
  %1364 = vmatpush1.bf16.msra.mxu0 %v1350
  %1365 = vmatprep.subr.bf16.mxu0 0
  %1366 = vmatpush1.bf16.msra.mxu0 %v1351
  %1367 = vmatprep.subr.bf16.mxu0 0
  %1368 = vmatpush1.bf16.msra.mxu0 0
  %1369 = vmatprep.subr.bf16.mxu0 0
  %1370 = vmatpush1.bf16.msra.mxu0 0
  %1371 = vmatprep.subr.bf16.mxu0 0
  %1372 = vmatpush1.bf16.msra.mxu0 0
  %1373 = vmatprep.subr.bf16.mxu0 0
  %1374 = vmatpush1.bf16.msra.mxu0 0
  %1375 = vmatprep.subr.bf16.mxu0 0
  %1376 = vmatpush1.bf16.msra.mxu0 0
  %1377 = vmatprep.subr.bf16.mxu0 0
  %1378 = vmatpush1.bf16.msra.mxu0 0
  %1379 = vmatprep.subr.bf16.mxu0 0
  %1380 = vmatpush1.bf16.msra.mxu0 0
  %1381 = vmatprep.subr.bf16.mxu0 0
  %1382 = vmatpush1.bf16.msra.mxu0 0
  %1383 = vmatprep.subr.bf16.mxu0 0
  %1384 = vmatpush1.bf16.msra.mxu0 0
  %1385 = vmatprep.subr.bf16.mxu0 0
  %1386 = vmatpush1.bf16.msra.mxu0 0
  %1387 = vmatprep.subr.bf16.mxu0 0
  %1388 = vmatpush1.bf16.msra.mxu0 0
  %1389 = vmatprep.subr.bf16.mxu0 0
  %1390 = vmatpush1.bf16.msra.mxu0 0
  %1391 = vmatprep.mubr.bf16.mxu0 0
  %1392 = vmatmul.mubr.bf16.gmra.mrb[0].mxu0 %v1357
  %v1393 = vpop.f32.mrb[0].mxu0
  %v1394 = vadd.f32 0.0, %v1393
  %v1395 = vpop.f32.mrb[0].mxu0
  %v1396 = vpop.f32.mrb[0].mxu0
  %v1397 = vpop.f32.mrb[0].mxu0
  %1398 = vdwg.mxu0
  %v1399 = vadd.f32 %v1322, %v1394
  %v1400 = vld [vmem:[%s6 + $0x4] sm:$0x1]
  %v1401 = vlaneseq
  %v1402 = vshrl.u32 %v1401, 7
  %v1403 = vsub.s32 0, %v1402
  %v1404 = vrot.slane %v1400, %v1403
  %v1405 = vadd.f32 %v1399, %v1404
  %v1406 = vmax.f32 %v1405, 0.0
  %v1407 = vpack.c.bf16 %v1406, %v1406
  %v1408 = vld [vmem:[%s4] sm:$0xf]
  %v1409 = vld [vmem:[%s4 + $0x4] sm:$0xf]
  %v1410 = vld [vmem:[%s4 + $0x8] sm:$0xf]
  %v1411 = vld [vmem:[%s4 + $0xc] sm:$0xf]
  %v1412 = vld [vmem:[%s4 + $0x10] sm:$0xf]
  %v1413 = vld [vmem:[%s4 + $0x14] sm:$0xf]
  %v1414 = vld [vmem:[%s4 + $0x18] sm:$0xf]
  %v1415 = vld [vmem:[%s4 + $0x1c] sm:$0xf]
  %v1416 = vld [vmem:[%s6 + $0x5] sm:$0x1]
  %v1417 = vlaneseq
  %v1418 = vshrl.u32 %v1417, 7
  %v1419 = vsub.s32 0, %v1418
  %v1420 = vrot.slane %v1416, %v1419
  %v1429 = vunpack.c.l.b16 %v1408
  %v1430 = vunpack.c.l.b16 %v1409
  %v1431 = vunpack.c.l.b16 %v1410
  %v1432 = vunpack.c.l.b16 %v1411
  %v1433 = vunpack.c.l.b16 %v1412
  %v1434 = vunpack.c.l.b16 %v1413
  %v1435 = vunpack.c.l.b16 %v1414
  %v1436 = vunpack.c.l.b16 %v1415
  %v1437 = vpack.c.b16 %v1430, %v1429
  %v1438 = vpack.c.b16 %v1432, %v1431
  %v1439 = vpack.c.b16 %v1434, %v1433
  %v1440 = vpack.c.b16 %v1436, %v1435
  %v1446 = vsel %vm769, %v1407, 0
  %1448 = vmatprep.subr.bf16.mxu0 0
  %1449 = vmatpush1.bf16.msra.mxu0 %v1437
  %1450 = vmatprep.subr.bf16.mxu0 0
  %1451 = vmatpush1.bf16.msra.mxu0 %v1438
  %1452 = vmatprep.subr.bf16.mxu0 0
  %1453 = vmatpush1.bf16.msra.mxu0 %v1439
  %1454 = vmatprep.subr.bf16.mxu0 0
  %1455 = vmatpush1.bf16.msra.mxu0 %v1440
  %1456 = vmatprep.subr.bf16.mxu0 0
  %1457 = vmatpush1.bf16.msra.mxu0 0
  %1458 = vmatprep.subr.bf16.mxu0 0
  %1459 = vmatpush1.bf16.msra.mxu0 0
  %1460 = vmatprep.subr.bf16.mxu0 0
  %1461 = vmatpush1.bf16.msra.mxu0 0
  %1462 = vmatprep.subr.bf16.mxu0 0
  %1463 = vmatpush1.bf16.msra.mxu0 0
  %1464 = vmatprep.subr.bf16.mxu0 0
  %1465 = vmatpush1.bf16.msra.mxu0 0
  %1466 = vmatprep.subr.bf16.mxu0 0
  %1467 = vmatpush1.bf16.msra.mxu0 0
  %1468 = vmatprep.subr.bf16.mxu0 0
  %1469 = vmatpush1.bf16.msra.mxu0 0
  %1470 = vmatprep.subr.bf16.mxu0 0
  %1471 = vmatpush1.bf16.msra.mxu0 0
  %1472 = vmatprep.subr.bf16.mxu0 0
  %1473 = vmatpush1.bf16.msra.mxu0 0
  %1474 = vmatprep.subr.bf16.mxu0 0
  %1475 = vmatpush1.bf16.msra.mxu0 0
  %1476 = vmatprep.subr.bf16.mxu0 0
  %1477 = vmatpush1.bf16.msra.mxu0 0
  %1478 = vmatprep.subr.bf16.mxu0 0
  %1479 = vmatpush1.bf16.msra.mxu0 0
  %1480 = vmatprep.mubr.bf16.mxu0 0
  %1481 = vmatmul.mubr.bf16.gmra.mrb[0].mxu0 %v1446
  %v1482 = vpop.f32.mrb[0].mxu0
  %v1483 = vadd.f32 %v1420, %v1482
  %v1484 = vpop.f32.mrb[0].mxu0
  %v1485 = vpop.f32.mrb[0].mxu0
  %v1486 = vpop.f32.mrb[0].mxu0
  %1487 = vdwg.mxu0
  %v1488 = vmax.f32 %v1483, 0.0
  %v1489 = vpack.c.bf16 %v1488, %v1488
  %v1490 = vld [vmem:[%s5] sm:$0xf]
  %v1491 = vld [vmem:[%s5 + $0x4] sm:$0xf]
  %v1492 = vld [vmem:[%s5 + $0x8] sm:$0xf]
  %v1493 = vld [vmem:[%s5 + $0xc] sm:$0xf]
  %v1494 = vld [vmem:[%s6 + $0x6] sm:$0x1]
  %v1495 = vlaneseq
  %v1496 = vshrl.u32 %v1495, 7
  %v1497 = vsub.s32 0, %v1496
  %v1498 = vrot.slane %v1494, %v1497
  %v1503 = vunpack.c.l.b16 %v1490
  %v1504 = vunpack.c.l.b16 %v1491
  %v1505 = vunpack.c.l.b16 %v1492
  %v1506 = vunpack.c.l.b16 %v1493
  %v1507 = vpack.c.b16 %v1504, %v1503
  %v1508 = vpack.c.b16 %v1506, %v1505
  %vm1511 = vcmask 261120
  %v1513 = vsel %vm1511, %v1489, 0
  %1515 = vmatprep.subr.bf16.mxu0 0
  %1516 = vmatpush1.bf16.msra.mxu0 %v1507
  %1517 = vmatprep.subr.bf16.mxu0 0
  %1518 = vmatpush1.bf16.msra.mxu0 %v1508
  %1519 = vmatprep.subr.bf16.mxu0 0
  %1520 = vmatpush1.bf16.msra.mxu0 0
  %1521 = vmatprep.subr.bf16.mxu0 0
  %1522 = vmatpush1.bf16.msra.mxu0 0
  %1523 = vmatprep.subr.bf16.mxu0 0
  %1524 = vmatpush1.bf16.msra.mxu0 0
  %1525 = vmatprep.subr.bf16.mxu0 0
  %1526 = vmatpush1.bf16.msra.mxu0 0
  %1527 = vmatprep.subr.bf16.mxu0 0
  %1528 = vmatpush1.bf16.msra.mxu0 0
  %1529 = vmatprep.subr.bf16.mxu0 0
  %1530 = vmatpush1.bf16.msra.mxu0 0
  %1531 = vmatprep.subr.bf16.mxu0 0
  %1532 = vmatpush1.bf16.msra.mxu0 0
  %1533 = vmatprep.subr.bf16.mxu0 0
  %1534 = vmatpush1.bf16.msra.mxu0 0
  %1535 = vmatprep.subr.bf16.mxu0 0
  %1536 = vmatpush1.bf16.msra.mxu0 0
  %1537 = vmatprep.subr.bf16.mxu0 0
  %1538 = vmatpush1.bf16.msra.mxu0 0
  %1539 = vmatprep.subr.bf16.mxu0 0
  %1540 = vmatpush1.bf16.msra.mxu0 0
  %1541 = vmatprep.subr.bf16.mxu0 0
  %1542 = vmatpush1.bf16.msra.mxu0 0
  %1543 = vmatprep.subr.bf16.mxu0 0
  %1544 = vmatpush1.bf16.msra.mxu0 0
  %1545 = vmatprep.subr.bf16.mxu0 0
  %1546 = vmatpush1.bf16.msra.mxu0 0
  %1547 = vmatprep.mubr.bf16.mxu0 0
  %1548 = vmatmul.mubr.bf16.gmra.mrb[0].mxu0 %v1513
  %v1549 = vpop.f32.mrb[0].mxu0
  %v1550 = vadd.f32 %v1498, %v1549
  %v1551 = vpop.f32.mrb[0].mxu0
  %v1552 = vpop.f32.mrb[0].mxu0
  %v1553 = vpop.f32.mrb[0].mxu0
  %1554 = vdwg.mxu0
  %v1555 = vand.u32 2147483647, %v1550
  %v1556 = vsub.f32 0.0, %v1555
  %v1557 = vmul.f32 %v1556, 1.442695
  %v1558 = vpow.pop %v1557
  %vm1559 = vcmp.ge.f32.partialorder %v1550, 0.0
  %v1560 = vadd.f32 %v1558, 1.0
  %v1561 = vrcp.pop %v1560
  %v1562 = vmul.f32 1.0, %v1561
  %v1563 = vmul.f32 %v1558, %v1561
  %v1564 = vsel %vm1559, %v1562, %v1563
  %vm1565 = vcmask 1024
  %1566 = vst.msk [vmem:[%s7] sm:$0x3] %vm1565, %v1564
  // Predicated region
  $region30: #{critic_forward.1} parent=0 // pred_check
    _
  $region31: #{critic_forward.1} parent=0 // pred_check_branch
    %1568 = sbr.rel (0) target = $region33
  $region32: #{critic_forward.1} parent=0 // pred_region
    _
  $region33: #{critic_forward.1} parent=0 // pred_fallthru
    _
  // Predicated region
  $region34: #{critic_forward.1} parent=0 // pred_check
    _
  $region35: #{critic_forward.1} parent=0 // pred_check_branch
    %1570 = sbr.rel (0) target = $region37
  $region36: #{critic_forward.1} parent=0 // pred_region
    _
  $region37: #{critic_forward.1} parent=0 // pred_fallthru
    _

</llo_original>
